<compile_context>
chip_gen: v5e
topology: v5e:2x2
jax: 0.10.0
libtpu: 0.0.40
codegen_flags: <defaults>
</compile_context>

<pallas_src>
import functools

import jax
import jax.numpy as jnp
from jax.experimental import pallas as pl
from jax.experimental.pallas import tpu as pltpu

LANE = 128


def _round_up(x, m):
    return (x + m - 1) // m * m


def _pad2d(x, rows, cols):
    r, c = x.shape
    return jnp.pad(x, ((0, rows - r), (0, cols - c)))


# ----------------------------------------------------------------------------
# Kernels
# ----------------------------------------------------------------------------
def _vae_full_kernel(
    # activations (per batch tile)
    x_ref, t_ref, noise_ref,
    # taskid2labelembedding / hidden2hidden
    w_t2l_ref, b_t2l_ref, w_h2h_ref, b_h2h_ref,
    # fused x-heads [prior | posterior_x], posterior hidden-part weight
    w_xh_ref, b_xh_ref, w_ph_ref,
    # fused posterior heads [mu | log_Sigma], fused prior heads [mu | log_Sigma]
    w_qh_ref, b_qh_ref, w_prh_ref, b_prh_ref,
    # outputs
    kl_ref, z_ref,
    *, o_pad,
):
    f32 = jnp.float32
    x = x_ref[...]
    t = t_ref[...]

    # ---- fused x-heads: one matmul feeds both prior pre-act and posterior x-part
    xh = jnp.dot(x, w_xh_ref[...], preferred_element_type=f32) + b_xh_ref[...]
    prior_pre = xh[:, :o_pad]
    post_x = xh[:, o_pad:]

    # ---- prior branch (fused mu / log_Sigma heads; keep pre-exp logits) ----
    P_z = jnp.tanh(prior_pre)
    prh = jnp.dot(P_z, w_prh_ref[...], preferred_element_type=f32) + b_prh_ref[...]
    P_mu = prh[:, :o_pad]
    pls = prh[:, o_pad:]                     # prior log_Sigma logits

    # ---- label embedding (prototype_emb is None path) ----
    t_sum = jnp.sum(t, axis=-1, keepdims=True)
    # guard against all-zero rows (only padded rows in practice); valid rows have sum>=1
    inv_tsum = pl.reciprocal(jnp.maximum(t_sum, 1.0), approx=True)
    le = (jnp.dot(t, w_t2l_ref[...], preferred_element_type=f32) + b_t2l_ref[...]) * inv_tsum
    le = jnp.dot(le, w_h2h_ref[...], preferred_element_type=f32) + b_h2h_ref[...]
    label_hidden = jnp.tanh(le)
    # dropout -> identity (eval mode)

    # ---- posterior branch (Linear on concat(x, label_hidden) == two matmuls) ----
    Q_z = jnp.tanh(post_x + jnp.dot(label_hidden, w_ph_ref[...], preferred_element_type=f32))
    qh = jnp.dot(Q_z, w_qh_ref[...], preferred_element_type=f32) + b_qh_ref[...]
    Q_mu = qh[:, :o_pad]
    qls = qh[:, o_pad:]                      # posterior log_Sigma logits

    # ---- reparameterised sample in log-space:  sigma = exp(0.5 * log_Sigma) ----
    z = Q_mu + noise_ref[...] * jnp.exp(0.5 * qls)

    # ---- KL in log-space:
    #   log(Q_S/P_S) = qls - pls ;  Q_S/P_S = exp(qls - pls) ;  1/P_S = exp(-pls)
    d = qls - pls
    diff = Q_mu - P_mu
    terms = d - jnp.exp(d) - diff * diff * jnp.exp(-pls) + 1.0   # padded cols == 0
    per_example = -0.5 * jnp.sum(terms, axis=-1, keepdims=True)

    kl_ref[...] = jnp.broadcast_to(per_example, kl_ref.shape)    # lane-dense store
    z_ref[...] = z


def _vae_prior_kernel(x_ref, w_pr_ref, b_pr_ref, w_mu_ref, b_mu_ref, z_ref):
    f32 = jnp.float32
    P_z = jnp.tanh(jnp.dot(x_ref[...], w_pr_ref[...], preferred_element_type=f32) + b_pr_ref[...])
    z_ref[...] = jnp.dot(P_z, w_mu_ref[...], preferred_element_type=f32) + b_mu_ref[...]


# ----------------------------------------------------------------------------
# Parameter init (deterministic; PyTorch-Linear-like uniform init)
# ----------------------------------------------------------------------------
def _linear_params(key, in_f, out_f):
    kw, kb = jax.random.split(key)
    bound = 1.0 / jnp.sqrt(jnp.float32(in_f))
    # stored pre-transposed: W is [in_f, out_f]; b is [1, out_f]
    w = jax.random.uniform(kw, (in_f, out_f), jnp.float32, -bound, bound)
    b = jax.random.uniform(kb, (1, out_f), jnp.float32, -bound, bound)
    return w, b


def init_vae_params(key, in_dim, out_dim, class_num, hidden_dim=None):
    if hidden_dim is None:
        hidden_dim = in_dim
    keys = jax.random.split(key, 8)
    p = {}
    p["t2l_w"], p["t2l_b"] = _linear_params(keys[0], class_num, hidden_dim)
    p["h2h_w"], p["h2h_b"] = _linear_params(keys[1], hidden_dim, hidden_dim)
    post_w, p["post_b"] = _linear_params(keys[2], in_dim + hidden_dim, out_dim)
    p["post_w_x"] = post_w[:in_dim, :]        # split the concat axis
    p["post_w_h"] = post_w[in_dim:, :]
    p["qmu_w"], p["qmu_b"] = _linear_params(keys[3], out_dim, out_dim)
    p["qls_w"], p["qls_b"] = _linear_params(keys[4], out_dim, out_dim)
    p["pr_w"], p["pr_b"] = _linear_params(keys[5], in_dim, out_dim)
    p["prmu_w"], p["prmu_b"] = _linear_params(keys[6], out_dim, out_dim)
    p["prls_w"], p["prls_b"] = _linear_params(keys[7], out_dim, out_dim)
    return p


def pack_vae_params(params, in_dim, out_dim, class_num, hidden_dim):
    """Zero-pad feature axes to lane multiples and fuse paired heads (done once)."""
    IN_P = _round_up(in_dim, LANE)
    H_P = _round_up(hidden_dim, LANE)
    O_P = _round_up(out_dim, LANE)
    C_P = _round_up(class_num, LANE)
    pk = {}
    pk["t2l_w"] = _pad2d(params["t2l_w"], C_P, H_P)
    pk["t2l_b"] = _pad2d(params["t2l_b"], 1, H_P)
    pk["h2h_w"] = _pad2d(params["h2h_w"], H_P, H_P)
    pk["h2h_b"] = _pad2d(params["h2h_b"], 1, H_P)
    # fused x-heads: [prior | posterior_x] (both consume x)
    pk["xheads_w"] = jnp.concatenate(
        [_pad2d(params["pr_w"], IN_P, O_P), _pad2d(params["post_w_x"], IN_P, O_P)], axis=1)
    pk["xheads_b"] = jnp.concatenate(
        [_pad2d(params["pr_b"], 1, O_P), _pad2d(params["post_b"], 1, O_P)], axis=1)
    pk["post_wh"] = _pad2d(params["post_w_h"], H_P, O_P)
    # fused posterior heads: [mu | log_Sigma]
    pk["qheads_w"] = jnp.concatenate(
        [_pad2d(params["qmu_w"], O_P, O_P), _pad2d(params["qls_w"], O_P, O_P)], axis=1)
    pk["qheads_b"] = jnp.concatenate(
        [_pad2d(params["qmu_b"], 1, O_P), _pad2d(params["qls_b"], 1, O_P)], axis=1)
    # fused prior heads: [mu | log_Sigma]
    pk["prheads_w"] = jnp.concatenate(
        [_pad2d(params["prmu_w"], O_P, O_P), _pad2d(params["prls_w"], O_P, O_P)], axis=1)
    pk["prheads_b"] = jnp.concatenate(
        [_pad2d(params["prmu_b"], 1, O_P), _pad2d(params["prls_b"], 1, O_P)], axis=1)
    # padded weights for the prior-only (targets=None) path
    pk["pr_w"] = _pad2d(params["pr_w"], IN_P, O_P)
    pk["pr_b"] = _pad2d(params["pr_b"], 1, O_P)
    pk["prmu_w"] = _pad2d(params["prmu_w"], O_P, O_P)
    pk["prmu_b"] = _pad2d(params["prmu_b"], 1, O_P)
    return pk


# ----------------------------------------------------------------------------
# Wrappers
# ----------------------------------------------------------------------------
_COMPILER_PARAMS = pltpu.CompilerParams(
    dimension_semantics=("parallel",),        # batch grid axis -> both v7x TCs
    vmem_limit_bytes=32 * 1024 * 1024,        # explicit budget (safe on v5e/v6e/v7x)
)


@functools.partial(jax.jit, static_argnames=("out_dim", "tile_b"))
def vae_forward_with_targets(packed, input_emb, targets, noise, *, out_dim, tile_b=8):
    """Returns (KL, z).  targets path, prototype_emb=None."""
    bs = input_emb.shape[0]
    IN_P = packed["xheads_w"].shape[0]
    O_P = packed["xheads_w"].shape[1] // 2
    C_P, H_P = packed["t2l_w"].shape

    B_pad = _round_up(bs, tile_b)
    grid = (B_pad // tile_b,)

    x = _pad2d(input_emb.astype(jnp.float32), B_pad, IN_P)
    t = _pad2d(targets.astype(jnp.float32), B_pad, C_P)
    nz = _pad2d(noise.astype(jnp.float32), B_pad, O_P)

    weights = (
        packed["t2l_w"], packed["t2l_b"], packed["h2h_w"], packed["h2h_b"],
        packed["xheads_w"], packed["xheads_b"], packed["post_wh"],
        packed["qheads_w"], packed["qheads_b"], packed["prheads_w"], packed["prheads_b"],
    )

    def row_spec(cols):
        return pl.BlockSpec((tile_b, cols), lambda i: (i, 0))

    def resident_spec(arr):
        return pl.BlockSpec(arr.shape, lambda i: (0, 0))   # weights stay VMEM-resident

    kernel = functools.partial(_vae_full_kernel, o_pad=O_P)
    kl_rows, z_full = pl.pallas_call(
        kernel,
        grid=grid,
        in_specs=[row_spec(IN_P), row_spec(C_P), row_spec(O_P)]
                 + [resident_spec(w) for w in weights],
        out_specs=(
            pl.BlockSpec((tile_b, LANE), lambda i: (i, 0)),   # per-example KL (lane-dense)
            pl.BlockSpec((tile_b, O_P), lambda i: (i, 0)),    # z
        ),
        out_shape=(
            jax.ShapeDtypeStruct((B_pad, LANE), jnp.float32),
            jax.ShapeDtypeStruct((B_pad, O_P), jnp.float32),
        ),
        compiler_params=_COMPILER_PARAMS,
    )(x, t, nz, *weights)

    # cross-tile reduction finished in the wrapper (padded rows sliced off)
    kl = jnp.mean(kl_rows[:bs, 0])
    z = z_full[:bs, :out_dim]
    return kl, z


@functools.partial(jax.jit, static_argnames=("out_dim", "tile_b"))
def vae_forward_prior_only(packed, input_emb, *, out_dim, tile_b=8):
    """targets=None path: z = prior_mu(tanh(prior(x))), KL is None."""
    bs = input_emb.shape[0]
    IN_P, O_P = packed["pr_w"].shape
    B_pad = _round_up(bs, tile_b)
    grid = (B_pad // tile_b,)

    x = _pad2d(input_emb.astype(jnp.float32), B_pad, IN_P)
    weights = (packed["pr_w"], packed["pr_b"], packed["prmu_w"], packed["prmu_b"])

    z_full = pl.pallas_call(
        _vae_prior_kernel,
        grid=grid,
        in_specs=[pl.BlockSpec((tile_b, IN_P), lambda i: (i, 0))]
                 + [pl.BlockSpec(w.shape, lambda i: (0, 0)) for w in weights],
        out_specs=pl.BlockSpec((tile_b, O_P), lambda i: (i, 0)),
        out_shape=jax.ShapeDtypeStruct((B_pad, O_P), jnp.float32),
        compiler_params=_COMPILER_PARAMS,
    )(x, *weights)
    return z_full[:bs, :out_dim]


# ----------------------------------------------------------------------------
# Pure-JAX reference (exact original formula, for verification)
# ----------------------------------------------------------------------------
def _ref_forward(params, x, targets, noise):
    P_z = jnp.tanh(x @ params["pr_w"] + params["pr_b"])
    P_mu = P_z @ params["prmu_w"] + params["prmu_b"]
    P_Sigma = jnp.exp(P_z @ params["prls_w"] + params["prls_b"])
    t = targets.astype(jnp.float32)
    le = (t @ params["t2l_w"] + params["t2l_b"]) / jnp.sum(t, axis=-1, keepdims=True)
    le = le @ params["h2h_w"] + params["h2h_b"]
    lh = jnp.tanh(le)
    Q_z = jnp.tanh(x @ params["post_w_x"] + lh @ params["post_w_h"] + params["post_b"])
    Q_mu = Q_z @ params["qmu_w"] + params["qmu_b"]
    Q_Sigma = jnp.exp(Q_z @ params["qls_w"] + params["qls_b"])
    z = Q_mu + noise * jnp.sqrt(Q_Sigma)
    ratio = Q_Sigma / P_Sigma
    kl = -0.5 * jnp.sum(
        jnp.log(ratio) - ratio - jnp.square(Q_mu - P_mu) / P_Sigma + 1.0, axis=-1
    ).mean()
    return kl, z


def _ref_prior(params, x):
    P_z = jnp.tanh(x @ params["pr_w"] + params["pr_b"])
    return P_z @ params["prmu_w"] + params["prmu_b"]


# ----------------------------------------------------------------------------
if __name__ == "__main__":
    bs, in_dim, out_dim, class_num = 13, 32, 16, 4   # bs=13 exercises batch padding + grid
    hidden_dim = in_dim  # default when hidden_dim=None
    tile_b = 8

    key = jax.random.PRNGKey(0)
    k_param, k_x, k_t, k_n = jax.random.split(key, 4)

    params = init_vae_params(k_param, in_dim, out_dim, class_num, hidden_dim)
    packed = pack_vae_params(params, in_dim, out_dim, class_num, hidden_dim)

    input_emb = jax.random.normal(k_x, (bs, in_dim), jnp.float32)
    targets = (jax.random.uniform(k_t, (bs, class_num)) > 0.5).astype(jnp.float32)
    targets = targets.at[:, 0].set(1.0)  # guarantee non-zero row sums (module precondition)
    # torch.randn_like(Q_sigma) equivalent, generated deterministically outside the kernel
    noise = jax.random.normal(k_n, (bs, out_dim), jnp.float32)

    kl, z = vae_forward_with_targets(
        packed, input_emb, targets, noise, out_dim=out_dim, tile_b=tile_b)
    z_prior = vae_forward_prior_only(packed, input_emb, out_dim=out_dim, tile_b=tile_b)
    jax.block_until_ready((kl, z, z_prior))

    # sanity check vs pure-JAX reference (approx reciprocal + log-space math -> loose-ish tol)
    kl_ref, z_ref = _ref_forward(params, input_emb, targets, noise)
    zp_ref = _ref_prior(params, input_emb)
    assert jnp.allclose(kl, kl_ref, atol=5e-3, rtol=5e-3), (kl, kl_ref)
    assert jnp.allclose(z, z_ref, atol=2e-3, rtol=2e-3)
    assert jnp.allclose(z_prior, zp_ref, atol=1e-4, rtol=1e-4)

    print("KERNEL_OK")
</pallas_src>

<mosaic_0001>
module attributes {stable_mosaic.version = 11 : i64} {
  func.func @_vae_full_kernel(%arg0: i32, %arg1: memref<8x128xf32, #tpu.memory_space<vmem>>, %arg2: memref<8x128xf32, #tpu.memory_space<vmem>>, %arg3: memref<8x128xf32, #tpu.memory_space<vmem>>, %arg4: memref<128x128xf32, #tpu.memory_space<vmem>>, %arg5: memref<1x128xf32, #tpu.memory_space<vmem>>, %arg6: memref<128x128xf32, #tpu.memory_space<vmem>>, %arg7: memref<1x128xf32, #tpu.memory_space<vmem>>, %arg8: memref<128x256xf32, #tpu.memory_space<vmem>>, %arg9: memref<1x256xf32, #tpu.memory_space<vmem>>, %arg10: memref<128x128xf32, #tpu.memory_space<vmem>>, %arg11: memref<128x256xf32, #tpu.memory_space<vmem>>, %arg12: memref<1x256xf32, #tpu.memory_space<vmem>>, %arg13: memref<128x256xf32, #tpu.memory_space<vmem>>, %arg14: memref<1x256xf32, #tpu.memory_space<vmem>>, %arg15: memref<8x128xf32, #tpu.memory_space<vmem>>, %arg16: memref<8x128xf32, #tpu.memory_space<vmem>>) attributes {dimension_semantics = [#tpu.dimension_semantics<parallel>], iteration_bounds = array<i64: 2>, scalar_prefetch = 0 : i64, scratch_operands = 0 : i64, tpu.core_type = #tpu.core_type<tc>, window_params = [{transform_indices = @transform_0, window_bounds = array<i64: 8, 128>}, {transform_indices = @transform_1, window_bounds = array<i64: 8, 128>}, {transform_indices = @transform_2, window_bounds = array<i64: 8, 128>}, {pipeline_mode = #tpu.pipeline_mode<synchronous>, transform_indices = @transform_3, window_bounds = array<i64: 128, 128>}, {pipeline_mode = #tpu.pipeline_mode<synchronous>, transform_indices = @transform_4, window_bounds = array<i64: 1, 128>}, {pipeline_mode = #tpu.pipeline_mode<synchronous>, transform_indices = @transform_5, window_bounds = array<i64: 128, 128>}, {pipeline_mode = #tpu.pipeline_mode<synchronous>, transform_indices = @transform_6, window_bounds = array<i64: 1, 128>}, {pipeline_mode = #tpu.pipeline_mode<synchronous>, transform_indices = @transform_7, window_bounds = array<i64: 128, 256>}, {pipeline_mode = #tpu.pipeline_mode<synchronous>, transform_indices = @transform_8, window_bounds = array<i64: 1, 256>}, {pipeline_mode = #tpu.pipeline_mode<synchronous>, transform_indices = @transform_9, window_bounds = array<i64: 128, 128>}, {pipeline_mode = #tpu.pipeline_mode<synchronous>, transform_indices = @transform_10, window_bounds = array<i64: 128, 256>}, {pipeline_mode = #tpu.pipeline_mode<synchronous>, transform_indices = @transform_11, window_bounds = array<i64: 1, 256>}, {pipeline_mode = #tpu.pipeline_mode<synchronous>, transform_indices = @transform_12, window_bounds = array<i64: 128, 256>}, {pipeline_mode = #tpu.pipeline_mode<synchronous>, transform_indices = @transform_13, window_bounds = array<i64: 1, 256>}, {transform_indices = @transform_14, window_bounds = array<i64: 8, 128>}, {transform_indices = @transform_15, window_bounds = array<i64: 8, 128>}]} {
    %c0 = arith.constant 0 : index
    %c0_0 = arith.constant 0 : index
    %0 = vector.load %arg1[%c0, %c0_0] : memref<8x128xf32, #tpu.memory_space<vmem>>, vector<8x128xf32>
    %c0_1 = arith.constant 0 : index
    %c0_2 = arith.constant 0 : index
    %1 = vector.load %arg2[%c0_1, %c0_2] : memref<8x128xf32, #tpu.memory_space<vmem>>, vector<8x128xf32>
    %c0_3 = arith.constant 0 : index
    %c0_4 = arith.constant 0 : index
    %2 = vector.load %arg8[%c0_3, %c0_4] : memref<128x256xf32, #tpu.memory_space<vmem>>, vector<128x256xf32>
    %cst = arith.constant dense<0.000000e+00> : vector<8x256xf32>
    %3 = tpu.matmul %0, %2, %cst {dimension_numbers = #tpu.dot_dimension_numbers<[1], [0], [0], [1], [0, 0, 1, 1], [], []>} : vector<8x128xf32>, vector<128x256xf32>, vector<8x256xf32> -> vector<8x256xf32>
    %c0_5 = arith.constant 0 : index
    %c0_6 = arith.constant 0 : index
    %4 = vector.load %arg9[%c0_5, %c0_6] : memref<1x256xf32, #tpu.memory_space<vmem>>, vector<1x256xf32>
    %5 = vector.broadcast %4 : vector<1x256xf32> to vector<8x256xf32>
    %6 = arith.addf %3, %5 : vector<8x256xf32>
    %7 = vector.extract_strided_slice %6 {offsets = [0, 0], sizes = [8, 128], strides = [1, 1]} : vector<8x256xf32> to vector<8x128xf32>
    %8 = vector.extract_strided_slice %6 {offsets = [0, 128], sizes = [8, 128], strides = [1, 1]} : vector<8x256xf32> to vector<8x128xf32>
    %9 = math.tanh %7 : vector<8x128xf32>
    %c0_7 = arith.constant 0 : index
    %c0_8 = arith.constant 0 : index
    %10 = vector.load %arg13[%c0_7, %c0_8] : memref<128x256xf32, #tpu.memory_space<vmem>>, vector<128x256xf32>
    %cst_9 = arith.constant dense<0.000000e+00> : vector<8x256xf32>
    %11 = tpu.matmul %9, %10, %cst_9 {dimension_numbers = #tpu.dot_dimension_numbers<[1], [0], [0], [1], [0, 0, 1, 1], [], []>} : vector<8x128xf32>, vector<128x256xf32>, vector<8x256xf32> -> vector<8x256xf32>
    %c0_10 = arith.constant 0 : index
    %c0_11 = arith.constant 0 : index
    %12 = vector.load %arg14[%c0_10, %c0_11] : memref<1x256xf32, #tpu.memory_space<vmem>>, vector<1x256xf32>
    %13 = vector.broadcast %12 : vector<1x256xf32> to vector<8x256xf32>
    %14 = arith.addf %11, %13 : vector<8x256xf32>
    %15 = vector.extract_strided_slice %14 {offsets = [0, 0], sizes = [8, 128], strides = [1, 1]} : vector<8x256xf32> to vector<8x128xf32>
    %16 = vector.extract_strided_slice %14 {offsets = [0, 128], sizes = [8, 128], strides = [1, 1]} : vector<8x256xf32> to vector<8x128xf32>
    %cst_12 = arith.constant dense<0.000000e+00> : vector<8xf32>
    %17 = vector.multi_reduction <add>, %1, %cst_12 [1] : vector<8x128xf32> to vector<8xf32>
    %18 = vector.shape_cast %17 : vector<8xf32> to vector<8x1xf32>
    %cst_13 = arith.constant 1.000000e+00 : f32
    %19 = vector.broadcast %cst_13 : f32 to vector<8x1xf32>
    %20 = arith.maximumf %18, %19 : vector<8x1xf32>
    %21 = tpu.reciprocal %20 {approx = true} : vector<8x1xf32> -> vector<8x1xf32>
    %c0_14 = arith.constant 0 : index
    %c0_15 = arith.constant 0 : index
    %22 = vector.load %arg4[%c0_14, %c0_15] : memref<128x128xf32, #tpu.memory_space<vmem>>, vector<128x128xf32>
    %cst_16 = arith.constant dense<0.000000e+00> : vector<8x128xf32>
    %23 = tpu.matmul %1, %22, %cst_16 {dimension_numbers = #tpu.dot_dimension_numbers<[1], [0], [0], [1], [0, 0, 1, 1], [], []>} : vector<8x128xf32>, vector<128x128xf32>, vector<8x128xf32> -> vector<8x128xf32>
    %c0_17 = arith.constant 0 : index
    %c0_18 = arith.constant 0 : index
    %24 = vector.load %arg5[%c0_17, %c0_18] : memref<1x128xf32, #tpu.memory_space<vmem>>, vector<1x128xf32>
    %25 = vector.broadcast %24 : vector<1x128xf32> to vector<8x128xf32>
    %26 = arith.addf %23, %25 : vector<8x128xf32>
    %27 = vector.broadcast %21 : vector<8x1xf32> to vector<8x128xf32>
    %28 = arith.mulf %26, %27 : vector<8x128xf32>
    %c0_19 = arith.constant 0 : index
    %c0_20 = arith.constant 0 : index
    %29 = vector.load %arg6[%c0_19, %c0_20] : memref<128x128xf32, #tpu.memory_space<vmem>>, vector<128x128xf32>
    %cst_21 = arith.constant dense<0.000000e+00> : vector<8x128xf32>
    %30 = tpu.matmul %28, %29, %cst_21 {dimension_numbers = #tpu.dot_dimension_numbers<[1], [0], [0], [1], [0, 0, 1, 1], [], []>} : vector<8x128xf32>, vector<128x128xf32>, vector<8x128xf32> -> vector<8x128xf32>
    %c0_22 = arith.constant 0 : index
    %c0_23 = arith.constant 0 : index
    %31 = vector.load %arg7[%c0_22, %c0_23] : memref<1x128xf32, #tpu.memory_space<vmem>>, vector<1x128xf32>
    %32 = vector.broadcast %31 : vector<1x128xf32> to vector<8x128xf32>
    %33 = arith.addf %30, %32 : vector<8x128xf32>
    %34 = math.tanh %33 : vector<8x128xf32>
    %c0_24 = arith.constant 0 : index
    %c0_25 = arith.constant 0 : index
    %35 = vector.load %arg10[%c0_24, %c0_25] : memref<128x128xf32, #tpu.memory_space<vmem>>, vector<128x128xf32>
    %cst_26 = arith.constant dense<0.000000e+00> : vector<8x128xf32>
    %36 = tpu.matmul %34, %35, %cst_26 {dimension_numbers = #tpu.dot_dimension_numbers<[1], [0], [0], [1], [0, 0, 1, 1], [], []>} : vector<8x128xf32>, vector<128x128xf32>, vector<8x128xf32> -> vector<8x128xf32>
    %37 = arith.addf %8, %36 : vector<8x128xf32>
    %38 = math.tanh %37 : vector<8x128xf32>
    %c0_27 = arith.constant 0 : index
    %c0_28 = arith.constant 0 : index
    %39 = vector.load %arg11[%c0_27, %c0_28] : memref<128x256xf32, #tpu.memory_space<vmem>>, vector<128x256xf32>
    %cst_29 = arith.constant dense<0.000000e+00> : vector<8x256xf32>
    %40 = tpu.matmul %38, %39, %cst_29 {dimension_numbers = #tpu.dot_dimension_numbers<[1], [0], [0], [1], [0, 0, 1, 1], [], []>} : vector<8x128xf32>, vector<128x256xf32>, vector<8x256xf32> -> vector<8x256xf32>
    %c0_30 = arith.constant 0 : index
    %c0_31 = arith.constant 0 : index
    %41 = vector.load %arg12[%c0_30, %c0_31] : memref<1x256xf32, #tpu.memory_space<vmem>>, vector<1x256xf32>
    %42 = vector.broadcast %41 : vector<1x256xf32> to vector<8x256xf32>
    %43 = arith.addf %40, %42 : vector<8x256xf32>
    %44 = vector.extract_strided_slice %43 {offsets = [0, 0], sizes = [8, 128], strides = [1, 1]} : vector<8x256xf32> to vector<8x128xf32>
    %45 = vector.extract_strided_slice %43 {offsets = [0, 128], sizes = [8, 128], strides = [1, 1]} : vector<8x256xf32> to vector<8x128xf32>
    %c0_32 = arith.constant 0 : index
    %c0_33 = arith.constant 0 : index
    %46 = vector.load %arg3[%c0_32, %c0_33] : memref<8x128xf32, #tpu.memory_space<vmem>>, vector<8x128xf32>
    %cst_34 = arith.constant 5.000000e-01 : f32
    %47 = vector.broadcast %cst_34 : f32 to vector<8x128xf32>
    %48 = arith.mulf %47, %45 : vector<8x128xf32>
    %49 = math.exp %48 : vector<8x128xf32>
    %50 = arith.mulf %46, %49 : vector<8x128xf32>
    %51 = arith.addf %44, %50 : vector<8x128xf32>
    %52 = arith.subf %45, %16 : vector<8x128xf32>
    %53 = arith.subf %44, %15 : vector<8x128xf32>
    %54 = math.exp %52 : vector<8x128xf32>
    %55 = arith.subf %52, %54 : vector<8x128xf32>
    %56 = arith.mulf %53, %53 : vector<8x128xf32>
    %cst_35 = arith.constant 0.000000e+00 : f32
    %57 = vector.broadcast %cst_35 : f32 to vector<8x128xf32>
    %58 = arith.subf %57, %16 : vector<8x128xf32>
    %59 = math.exp %58 : vector<8x128xf32>
    %60 = arith.mulf %56, %59 : vector<8x128xf32>
    %61 = arith.subf %55, %60 : vector<8x128xf32>
    %cst_36 = arith.constant 1.000000e+00 : f32
    %62 = vector.broadcast %cst_36 : f32 to vector<8x128xf32>
    %63 = arith.addf %61, %62 : vector<8x128xf32>
    %cst_37 = arith.constant dense<0.000000e+00> : vector<8xf32>
    %64 = vector.multi_reduction <add>, %63, %cst_37 [1] : vector<8x128xf32> to vector<8xf32>
    %65 = vector.shape_cast %64 : vector<8xf32> to vector<8x1xf32>
    %cst_38 = arith.constant -5.000000e-01 : f32
    %66 = vector.broadcast %cst_38 : f32 to vector<8x1xf32>
    %67 = arith.mulf %66, %65 : vector<8x1xf32>
    %68 = vector.shape_cast %67 : vector<8x1xf32> to vector<8x1xf32>
    %69 = vector.broadcast %68 : vector<8x1xf32> to vector<8x128xf32>
    %c0_39 = arith.constant 0 : index
    %c0_40 = arith.constant 0 : index
    %70 = vector.load %arg15[%c0_39, %c0_40] : memref<8x128xf32, #tpu.memory_space<vmem>>, vector<8x128xf32>
    tpu.vector_store %arg15[%c0_39, %c0_40], %69 {strides = array<i32>} : memref<8x128xf32, #tpu.memory_space<vmem>>, vector<8x128xf32>,
    %c0_41 = arith.constant 0 : index
    %c0_42 = arith.constant 0 : index
    %71 = vector.load %arg16[%c0_41, %c0_42] : memref<8x128xf32, #tpu.memory_space<vmem>>, vector<8x128xf32>
    tpu.vector_store %arg16[%c0_41, %c0_42], %51 {strides = array<i32>} : memref<8x128xf32, #tpu.memory_space<vmem>>, vector<8x128xf32>,
    return
  }
  func.func @transform_0(%arg0: i32) -> (i32, i32) {
    %c0_i32 = arith.constant 0 : i32
    %c0_i32_0 = arith.constant 0 : i32
    return %arg0, %c0_i32 : i32, i32
  }
  func.func @transform_1(%arg0: i32) -> (i32, i32) {
    %c0_i32 = arith.constant 0 : i32
    %c0_i32_0 = arith.constant 0 : i32
    return %arg0, %c0_i32 : i32, i32
  }
  func.func @transform_2(%arg0: i32) -> (i32, i32) {
    %c0_i32 = arith.constant 0 : i32
    %c0_i32_0 = arith.constant 0 : i32
    return %arg0, %c0_i32 : i32, i32
  }
  func.func @transform_3(%arg0: i32) -> (i32, i32) {
    %c0_i32 = arith.constant 0 : i32
    %c0_i32_0 = arith.constant 0 : i32
    %c0_i32_1 = arith.constant 0 : i32
    return %c0_i32, %c0_i32_0 : i32, i32
  }
  func.func @transform_4(%arg0: i32) -> (i32, i32) {
    %c0_i32 = arith.constant 0 : i32
    %c0_i32_0 = arith.constant 0 : i32
    %c0_i32_1 = arith.constant 0 : i32
    return %c0_i32, %c0_i32_0 : i32, i32
  }
  func.func @transform_5(%arg0: i32) -> (i32, i32) {
    %c0_i32 = arith.constant 0 : i32
    %c0_i32_0 = arith.constant 0 : i32
    %c0_i32_1 = arith.constant 0 : i32
    return %c0_i32, %c0_i32_0 : i32, i32
  }
  func.func @transform_6(%arg0: i32) -> (i32, i32) {
    %c0_i32 = arith.constant 0 : i32
    %c0_i32_0 = arith.constant 0 : i32
    %c0_i32_1 = arith.constant 0 : i32
    return %c0_i32, %c0_i32_0 : i32, i32
  }
  func.func @transform_7(%arg0: i32) -> (i32, i32) {
    %c0_i32 = arith.constant 0 : i32
    %c0_i32_0 = arith.constant 0 : i32
    %c0_i32_1 = arith.constant 0 : i32
    return %c0_i32, %c0_i32_0 : i32, i32
  }
  func.func @transform_8(%arg0: i32) -> (i32, i32) {
    %c0_i32 = arith.constant 0 : i32
    %c0_i32_0 = arith.constant 0 : i32
    %c0_i32_1 = arith.constant 0 : i32
    return %c0_i32, %c0_i32_0 : i32, i32
  }
  func.func @transform_9(%arg0: i32) -> (i32, i32) {
    %c0_i32 = arith.constant 0 : i32
    %c0_i32_0 = arith.constant 0 : i32
    %c0_i32_1 = arith.constant 0 : i32
    return %c0_i32, %c0_i32_0 : i32, i32
  }
  func.func @transform_10(%arg0: i32) -> (i32, i32) {
    %c0_i32 = arith.constant 0 : i32
    %c0_i32_0 = arith.constant 0 : i32
    %c0_i32_1 = arith.constant 0 : i32
    return %c0_i32, %c0_i32_0 : i32, i32
  }
  func.func @transform_11(%arg0: i32) -> (i32, i32) {
    %c0_i32 = arith.constant 0 : i32
    %c0_i32_0 = arith.constant 0 : i32
    %c0_i32_1 = arith.constant 0 : i32
    return %c0_i32, %c0_i32_0 : i32, i32
  }
  func.func @transform_12(%arg0: i32) -> (i32, i32) {
    %c0_i32 = arith.constant 0 : i32
    %c0_i32_0 = arith.constant 0 : i32
    %c0_i32_1 = arith.constant 0 : i32
    return %c0_i32, %c0_i32_0 : i32, i32
  }
  func.func @transform_13(%arg0: i32) -> (i32, i32) {
    %c0_i32 = arith.constant 0 : i32
    %c0_i32_0 = arith.constant 0 : i32
    %c0_i32_1 = arith.constant 0 : i32
    return %c0_i32, %c0_i32_0 : i32, i32
  }
  func.func @transform_14(%arg0: i32) -> (i32, i32) {
    %c0_i32 = arith.constant 0 : i32
    %c0_i32_0 = arith.constant 0 : i32
    return %arg0, %c0_i32 : i32, i32
  }
  func.func @transform_15(%arg0: i32) -> (i32, i32) {
    %c0_i32 = arith.constant 0 : i32
    %c0_i32_0 = arith.constant 0 : i32
    return %arg0, %c0_i32 : i32, i32
  }
}

</mosaic_0001>

<llo_original>
// kernel: vae_forward_with_targets.1
$region0: #{vae_forward_with_targets.1}
  #allocation0 [shape = 'u32[]', space=smem, size = 0x4, offset = 0x4, fixed_abs, tag = 'smem constant byte address 0x4 - core index']
  #allocation1 [shape = 'u32[72,128]{1,0:T(1,128)}', space=vmem, size = 0x9000, scoped, tag = 'internal scratch']
  %s0 = inlined_call_operand.vmem [shape: f32[16,128], index: 0, kind: input, shape index: {}]
  %s1 = inlined_call_operand.vmem [shape: f32[16,128], index: 1, kind: input, shape index: {}]
  %s2 = inlined_call_operand.vmem [shape: f32[16,128], index: 2, kind: input, shape index: {}]
  %s3 = inlined_call_operand.hbm [shape: f32[128,128], index: 3, kind: input, shape index: {}]
  %s4 = inlined_call_operand.vmem [shape: f32[1,128], index: 4, kind: input, shape index: {}]
  %s5 = inlined_call_operand.hbm [shape: f32[128,128], index: 5, kind: input, shape index: {}]
  %s6 = inlined_call_operand.vmem [shape: f32[1,128], index: 6, kind: input, shape index: {}]
  %s7 = inlined_call_operand.hbm [shape: f32[128,256], index: 7, kind: input, shape index: {}]
  %s8 = inlined_call_operand.vmem [shape: f32[1,256], index: 8, kind: input, shape index: {}]
  %s9 = inlined_call_operand.hbm [shape: f32[128,128], index: 9, kind: input, shape index: {}]
  %s10 = inlined_call_operand.hbm [shape: f32[128,256], index: 10, kind: input, shape index: {}]
  %s11 = inlined_call_operand.vmem [shape: f32[1,256], index: 11, kind: input, shape index: {}]
  %s12 = inlined_call_operand.hbm [shape: f32[128,256], index: 12, kind: input, shape index: {}]
  %s13 = inlined_call_operand.vmem [shape: f32[1,256], index: 13, kind: input, shape index: {}]
  %s14 = inlined_call_operand.vmem [shape: f32[16,128], index: 14, kind: output, shape index: {0}]
  %s15 = inlined_call_operand.hbm [shape: f32[16,128], index: 15, kind: output, shape index: {1}]
  %16 = xla_tuple %s14, %s15
  %s17 = sld [smem:[#allocation0]]
  $region121: #{vae_forward_with_targets.1} parent=0
    _
  %s19 = ssub.s32 1, %s17
  %s20 = scalar_select 0, %s19, %s17
  $region1: #{vae_forward_with_targets.1} parent=0
    #allocation2 [shape = 'u8[65536]{0}', space=vmem, size = 0x10000, scoped, tag = 'input window, operand 3, single buffered']
    #allocation3 [shape = 's32[2]{0}', space=sflag, size = 0x8, scoped, tag = 'scoped memory for vae_forward_with_targets.1']
    #allocation4 [shape = 's32[2]{0}', space=sflag, size = 0x8, scoped, tag = 'scoped memory for vae_forward_with_targets.1']
    #allocation5 [shape = 'u8[65536]{0}', space=vmem, size = 0x10000, scoped, tag = 'input window, operand 5, single buffered']
    #allocation6 [shape = 's32[1]{0}', space=sflag, size = 0x4, scoped, tag = 'scoped memory for vae_forward_with_targets.1']
    #allocation7 [shape = 'u8[131072]{0}', space=vmem, size = 0x20000, scoped, tag = 'input window, operand 7, single buffered']
    #allocation8 [shape = 'u8[65536]{0}', space=vmem, size = 0x10000, scoped, tag = 'input window, operand 9, single buffered']
    #allocation9 [shape = 's32[1]{0}', space=sflag, size = 0x4, scoped, tag = 'scoped memory for vae_forward_with_targets.1']
    #allocation10 [shape = 'u8[131072]{0}', space=vmem, size = 0x20000, scoped, tag = 'input window, operand 10, single buffered']
    #allocation11 [shape = 'u8[131072]{0}', space=vmem, size = 0x20000, scoped, tag = 'input window, operand 12, single buffered']
    #allocation12 [shape = 's32[1]{0}', space=sflag, size = 0x4, scoped, tag = 'scoped memory for vae_forward_with_targets.1']
    #allocation13 [shape = 'u8[8192]{0}', space=vmem, size = 0x2000, scoped, tag = 'output window, operand 1']
    %21 = vsyncpa [#allocation3], 0
    %22 = vsyncpa [#allocation6], 0
    %23 = vsyncpa [#allocation9], 0
    %24 = vsyncpa [#allocation12], 0
    %25 = vsyncpa [#allocation4], 0
    %s26 = scalar_lea.sflag [#allocation4], 1
    %27 = vsyncpa %s26, 0
    loop: start=0, step=1, limit=4
    $region2: #{vae_forward_with_targets.1} parent=1 // loop_pre_header
      _
    $region3: #{vae_forward_with_targets.1} parent=1 // loop_header
      %s29 = sphi 0, %s33
      %p30 = scmp.ge.s32.totalorder %s29, 4
      %s39 = sphi 0, %s41
      %s42 = sphi 0, %s39
      %s43 = sphi 0, %s42
      %s59 = sphi 0, %s43
      %s65 = sphi 0, %s67
      %s68 = sphi 0, %s65
      %s69 = sphi 0, %s68
      %s85 = sphi 0, %s69
      %s91 = sphi 0, %s93
      %s94 = sphi 0, %s91
      %s95 = sphi 0, %s94
      %s111 = sphi 0, %s95
      %s115 = sphi 0, %s115
      %s117 = sphi 0, %s115
      %s118 = sphi 0, %s117
      %s132 = sphi 0, %s118
      %s136 = sphi 0, %s136
      %s138 = sphi 0, %s136
      %s139 = sphi 0, %s138
      %s153 = sphi 0, %s139
      %s157 = sphi 0, %s157
      %s159 = sphi 0, %s157
      %s160 = sphi 0, %s159
      %s174 = sphi 0, %s160
      %s178 = sphi 0, %s178
      %s180 = sphi 0, %s178
      %s181 = sphi 0, %s180
      %s195 = sphi 0, %s181
      %s199 = sphi 0, %s199
      %s201 = sphi 0, %s199
      %s202 = sphi 0, %s201
      %s216 = sphi 0, %s202
      %s220 = sphi 0, %s220
      %s222 = sphi 0, %s220
      %s223 = sphi 0, %s222
      %s237 = sphi 0, %s223
      %s241 = sphi 0, %s241
      %s243 = sphi 0, %s241
      %s244 = sphi 0, %s243
      %s258 = sphi 0, %s244
      %s262 = sphi 0, %s262
      %s264 = sphi 0, %s262
      %s265 = sphi 0, %s264
      %s279 = sphi 0, %s265
      %s283 = sphi 0, %s283
      %s285 = sphi 0, %s283
      %s286 = sphi 0, %s285
      %s300 = sphi 0, %s286
      %s304 = sphi 0, %s304
      %s306 = sphi 0, %s304
      %s307 = sphi 0, %s306
      %s321 = sphi 0, %s307
      %s325 = sphi 0, %s325
      %s327 = sphi 0, %s325
      %s328 = sphi 0, %s327
      %s342 = sphi 0, %s328
      %s348 = sphi 0, %s350
      %s351 = sphi 0, %s348
      %s352 = sphi 0, %s351
      %s368 = sphi 0, %s352
      %s374 = sphi 0, %s376
      %s377 = sphi 0, %s374
      %s378 = sphi 0, %s377
      %s394 = sphi 0, %s378
    $region4: #{vae_forward_with_targets.1} parent=1 // loop_header_branch
      %32 = sbr.rel (%p30) target = $region8
    $region5: #{vae_forward_with_targets.1} parent=1 // loop_body
      %s34 = ssub.s32 %s29, 1
      %s35 = ssub.s32 %s29, 2
      %s36 = sadd.s32 %s29, 1
      %s37 = ssub.s32 %s29, %s36
      %p38 = scmp.eq.s32.totalorder %s37, 0
      %s40 = sadd.s32 %s39, 1
      %s41 = scalar_select %p38, %s39, %s40
      %p44 = pneg %p38
      %p45 = scmp.eq.s32.totalorder %s29, 1
      %p46 = por %p44, %p45
      %p47 = scmp.ne.s32.totalorder %s39, %s42
      %p48 = scmp.eq.s32.totalorder %s29, 0
      %p49 = por %p47, %p48
      %p50 = scmp.ne.s32.totalorder %s39, %s42
      %p51 = scmp.eq.s32.totalorder %s34, 1
      %p52 = por %p50, %p51
      %p53 = scmp.ne.s32.totalorder %s42, %s43
      %p54 = scmp.eq.s32.totalorder %s34, 0
      %p55 = por %p53, %p54
      %p56 = scmp.ne.s32.totalorder %s42, %s43
      %p57 = scmp.eq.s32.totalorder %s35, 1
      %p58 = por %p56, %p57
      %p60 = scmp.ne.s32.totalorder %s43, %s59
      %p61 = scmp.eq.s32.totalorder %s35, 0
      %p62 = por %p60, %p61
      %s63 = ssub.s32 %s29, %s36
      %p64 = scmp.eq.s32.totalorder %s63, 0
      %s66 = sadd.s32 %s65, 1
      %s67 = scalar_select %p64, %s65, %s66
      %p70 = pneg %p64
      %p71 = scmp.eq.s32.totalorder %s29, 1
      %p72 = por %p70, %p71
      %p73 = scmp.ne.s32.totalorder %s65, %s68
      %p74 = scmp.eq.s32.totalorder %s29, 0
      %p75 = por %p73, %p74
      %p76 = scmp.ne.s32.totalorder %s65, %s68
      %p77 = scmp.eq.s32.totalorder %s34, 1
      %p78 = por %p76, %p77
      %p79 = scmp.ne.s32.totalorder %s68, %s69
      %p80 = scmp.eq.s32.totalorder %s34, 0
      %p81 = por %p79, %p80
      %p82 = scmp.ne.s32.totalorder %s68, %s69
      %p83 = scmp.eq.s32.totalorder %s35, 1
      %p84 = por %p82, %p83
      %p86 = scmp.ne.s32.totalorder %s69, %s85
      %p87 = scmp.eq.s32.totalorder %s35, 0
      %p88 = por %p86, %p87
      %s89 = ssub.s32 %s29, %s36
      %p90 = scmp.eq.s32.totalorder %s89, 0
      %s92 = sadd.s32 %s91, 1
      %s93 = scalar_select %p90, %s91, %s92
      %p96 = pneg %p90
      %p97 = scmp.eq.s32.totalorder %s29, 1
      %p98 = por %p96, %p97
      %p99 = scmp.ne.s32.totalorder %s91, %s94
      %p100 = scmp.eq.s32.totalorder %s29, 0
      %p101 = por %p99, %p100
      %p102 = scmp.ne.s32.totalorder %s91, %s94
      %p103 = scmp.eq.s32.totalorder %s34, 1
      %p104 = por %p102, %p103
      %p105 = scmp.ne.s32.totalorder %s94, %s95
      %p106 = scmp.eq.s32.totalorder %s34, 0
      %p107 = por %p105, %p106
      %p108 = scmp.ne.s32.totalorder %s94, %s95
      %p109 = scmp.eq.s32.totalorder %s35, 1
      %p110 = por %p108, %p109
      %p112 = scmp.ne.s32.totalorder %s95, %s111
      %p113 = scmp.eq.s32.totalorder %s35, 0
      %p114 = por %p112, %p113
      %s116 = sadd.s32 %s115, 1
      %p119 = scmp.eq.s32.totalorder %s29, 1
      %p120 = scmp.ne.s32.totalorder %s115, %s117
      %p121 = scmp.eq.s32.totalorder %s29, 0
      %p122 = por %p120, %p121
      %p123 = scmp.ne.s32.totalorder %s115, %s117
      %p124 = scmp.eq.s32.totalorder %s34, 1
      %p125 = por %p123, %p124
      %p126 = scmp.ne.s32.totalorder %s117, %s118
      %p127 = scmp.eq.s32.totalorder %s34, 0
      %p128 = por %p126, %p127
      %p129 = scmp.ne.s32.totalorder %s117, %s118
      %p130 = scmp.eq.s32.totalorder %s35, 1
      %p131 = por %p129, %p130
      %p133 = scmp.ne.s32.totalorder %s118, %s132
      %p134 = scmp.eq.s32.totalorder %s35, 0
      %p135 = por %p133, %p134
      %s137 = sadd.s32 %s136, 1
      %p140 = scmp.eq.s32.totalorder %s29, 1
      %p141 = scmp.ne.s32.totalorder %s136, %s138
      %p142 = scmp.eq.s32.totalorder %s29, 0
      %p143 = por %p141, %p142
      %p144 = scmp.ne.s32.totalorder %s136, %s138
      %p145 = scmp.eq.s32.totalorder %s34, 1
      %p146 = por %p144, %p145
      %p147 = scmp.ne.s32.totalorder %s138, %s139
      %p148 = scmp.eq.s32.totalorder %s34, 0
      %p149 = por %p147, %p148
      %p150 = scmp.ne.s32.totalorder %s138, %s139
      %p151 = scmp.eq.s32.totalorder %s35, 1
      %p152 = por %p150, %p151
      %p154 = scmp.ne.s32.totalorder %s139, %s153
      %p155 = scmp.eq.s32.totalorder %s35, 0
      %p156 = por %p154, %p155
      %s158 = sadd.s32 %s157, 1
      %p161 = scmp.eq.s32.totalorder %s29, 1
      %p162 = scmp.ne.s32.totalorder %s157, %s159
      %p163 = scmp.eq.s32.totalorder %s29, 0
      %p164 = por %p162, %p163
      %p165 = scmp.ne.s32.totalorder %s157, %s159
      %p166 = scmp.eq.s32.totalorder %s34, 1
      %p167 = por %p165, %p166
      %p168 = scmp.ne.s32.totalorder %s159, %s160
      %p169 = scmp.eq.s32.totalorder %s34, 0
      %p170 = por %p168, %p169
      %p171 = scmp.ne.s32.totalorder %s159, %s160
      %p172 = scmp.eq.s32.totalorder %s35, 1
      %p173 = por %p171, %p172
      %p175 = scmp.ne.s32.totalorder %s160, %s174
      %p176 = scmp.eq.s32.totalorder %s35, 0
      %p177 = por %p175, %p176
      %s179 = sadd.s32 %s178, 1
      %p182 = scmp.eq.s32.totalorder %s29, 1
      %p183 = scmp.ne.s32.totalorder %s178, %s180
      %p184 = scmp.eq.s32.totalorder %s29, 0
      %p185 = por %p183, %p184
      %p186 = scmp.ne.s32.totalorder %s178, %s180
      %p187 = scmp.eq.s32.totalorder %s34, 1
      %p188 = por %p186, %p187
      %p189 = scmp.ne.s32.totalorder %s180, %s181
      %p190 = scmp.eq.s32.totalorder %s34, 0
      %p191 = por %p189, %p190
      %p192 = scmp.ne.s32.totalorder %s180, %s181
      %p193 = scmp.eq.s32.totalorder %s35, 1
      %p194 = por %p192, %p193
      %p196 = scmp.ne.s32.totalorder %s181, %s195
      %p197 = scmp.eq.s32.totalorder %s35, 0
      %p198 = por %p196, %p197
      %s200 = sadd.s32 %s199, 1
      %p203 = scmp.eq.s32.totalorder %s29, 1
      %p204 = scmp.ne.s32.totalorder %s199, %s201
      %p205 = scmp.eq.s32.totalorder %s29, 0
      %p206 = por %p204, %p205
      %p207 = scmp.ne.s32.totalorder %s199, %s201
      %p208 = scmp.eq.s32.totalorder %s34, 1
      %p209 = por %p207, %p208
      %p210 = scmp.ne.s32.totalorder %s201, %s202
      %p211 = scmp.eq.s32.totalorder %s34, 0
      %p212 = por %p210, %p211
      %p213 = scmp.ne.s32.totalorder %s201, %s202
      %p214 = scmp.eq.s32.totalorder %s35, 1
      %p215 = por %p213, %p214
      %p217 = scmp.ne.s32.totalorder %s202, %s216
      %p218 = scmp.eq.s32.totalorder %s35, 0
      %p219 = por %p217, %p218
      %s221 = sadd.s32 %s220, 1
      %p224 = scmp.eq.s32.totalorder %s29, 1
      %p225 = scmp.ne.s32.totalorder %s220, %s222
      %p226 = scmp.eq.s32.totalorder %s29, 0
      %p227 = por %p225, %p226
      %p228 = scmp.ne.s32.totalorder %s220, %s222
      %p229 = scmp.eq.s32.totalorder %s34, 1
      %p230 = por %p228, %p229
      %p231 = scmp.ne.s32.totalorder %s222, %s223
      %p232 = scmp.eq.s32.totalorder %s34, 0
      %p233 = por %p231, %p232
      %p234 = scmp.ne.s32.totalorder %s222, %s223
      %p235 = scmp.eq.s32.totalorder %s35, 1
      %p236 = por %p234, %p235
      %p238 = scmp.ne.s32.totalorder %s223, %s237
      %p239 = scmp.eq.s32.totalorder %s35, 0
      %p240 = por %p238, %p239
      %s242 = sadd.s32 %s241, 1
      %p245 = scmp.eq.s32.totalorder %s29, 1
      %p246 = scmp.ne.s32.totalorder %s241, %s243
      %p247 = scmp.eq.s32.totalorder %s29, 0
      %p248 = por %p246, %p247
      %p249 = scmp.ne.s32.totalorder %s241, %s243
      %p250 = scmp.eq.s32.totalorder %s34, 1
      %p251 = por %p249, %p250
      %p252 = scmp.ne.s32.totalorder %s243, %s244
      %p253 = scmp.eq.s32.totalorder %s34, 0
      %p254 = por %p252, %p253
      %p255 = scmp.ne.s32.totalorder %s243, %s244
      %p256 = scmp.eq.s32.totalorder %s35, 1
      %p257 = por %p255, %p256
      %p259 = scmp.ne.s32.totalorder %s244, %s258
      %p260 = scmp.eq.s32.totalorder %s35, 0
      %p261 = por %p259, %p260
      %s263 = sadd.s32 %s262, 1
      %p266 = scmp.eq.s32.totalorder %s29, 1
      %p267 = scmp.ne.s32.totalorder %s262, %s264
      %p268 = scmp.eq.s32.totalorder %s29, 0
      %p269 = por %p267, %p268
      %p270 = scmp.ne.s32.totalorder %s262, %s264
      %p271 = scmp.eq.s32.totalorder %s34, 1
      %p272 = por %p270, %p271
      %p273 = scmp.ne.s32.totalorder %s264, %s265
      %p274 = scmp.eq.s32.totalorder %s34, 0
      %p275 = por %p273, %p274
      %p276 = scmp.ne.s32.totalorder %s264, %s265
      %p277 = scmp.eq.s32.totalorder %s35, 1
      %p278 = por %p276, %p277
      %p280 = scmp.ne.s32.totalorder %s265, %s279
      %p281 = scmp.eq.s32.totalorder %s35, 0
      %p282 = por %p280, %p281
      %s284 = sadd.s32 %s283, 1
      %p287 = scmp.eq.s32.totalorder %s29, 1
      %p288 = scmp.ne.s32.totalorder %s283, %s285
      %p289 = scmp.eq.s32.totalorder %s29, 0
      %p290 = por %p288, %p289
      %p291 = scmp.ne.s32.totalorder %s283, %s285
      %p292 = scmp.eq.s32.totalorder %s34, 1
      %p293 = por %p291, %p292
      %p294 = scmp.ne.s32.totalorder %s285, %s286
      %p295 = scmp.eq.s32.totalorder %s34, 0
      %p296 = por %p294, %p295
      %p297 = scmp.ne.s32.totalorder %s285, %s286
      %p298 = scmp.eq.s32.totalorder %s35, 1
      %p299 = por %p297, %p298
      %p301 = scmp.ne.s32.totalorder %s286, %s300
      %p302 = scmp.eq.s32.totalorder %s35, 0
      %p303 = por %p301, %p302
      %s305 = sadd.s32 %s304, 1
      %p308 = scmp.eq.s32.totalorder %s29, 1
      %p309 = scmp.ne.s32.totalorder %s304, %s306
      %p310 = scmp.eq.s32.totalorder %s29, 0
      %p311 = por %p309, %p310
      %p312 = scmp.ne.s32.totalorder %s304, %s306
      %p313 = scmp.eq.s32.totalorder %s34, 1
      %p314 = por %p312, %p313
      %p315 = scmp.ne.s32.totalorder %s306, %s307
      %p316 = scmp.eq.s32.totalorder %s34, 0
      %p317 = por %p315, %p316
      %p318 = scmp.ne.s32.totalorder %s306, %s307
      %p319 = scmp.eq.s32.totalorder %s35, 1
      %p320 = por %p318, %p319
      %p322 = scmp.ne.s32.totalorder %s307, %s321
      %p323 = scmp.eq.s32.totalorder %s35, 0
      %p324 = por %p322, %p323
      %s326 = sadd.s32 %s325, 1
      %p329 = scmp.eq.s32.totalorder %s29, 1
      %p330 = scmp.ne.s32.totalorder %s325, %s327
      %p331 = scmp.eq.s32.totalorder %s29, 0
      %p332 = por %p330, %p331
      %p333 = scmp.ne.s32.totalorder %s325, %s327
      %p334 = scmp.eq.s32.totalorder %s34, 1
      %p335 = por %p333, %p334
      %p336 = scmp.ne.s32.totalorder %s327, %s328
      %p337 = scmp.eq.s32.totalorder %s34, 0
      %p338 = por %p336, %p337
      %p339 = scmp.ne.s32.totalorder %s327, %s328
      %p340 = scmp.eq.s32.totalorder %s35, 1
      %p341 = por %p339, %p340
      %p343 = scmp.ne.s32.totalorder %s328, %s342
      %p344 = scmp.eq.s32.totalorder %s35, 0
      %p345 = por %p343, %p344
      %s346 = ssub.s32 %s29, %s36
      %p347 = scmp.eq.s32.totalorder %s346, 0
      %s349 = sadd.s32 %s348, 1
      %s350 = scalar_select %p347, %s348, %s349
      %p353 = pneg %p347
      %p354 = scmp.eq.s32.totalorder %s29, 1
      %p355 = por %p353, %p354
      %p356 = scmp.ne.s32.totalorder %s348, %s351
      %p357 = scmp.eq.s32.totalorder %s29, 0
      %p358 = por %p356, %p357
      %p359 = scmp.ne.s32.totalorder %s348, %s351
      %p360 = scmp.eq.s32.totalorder %s34, 1
      %p361 = por %p359, %p360
      %p362 = scmp.ne.s32.totalorder %s351, %s352
      %p363 = scmp.eq.s32.totalorder %s34, 0
      %p364 = por %p362, %p363
      %p365 = scmp.ne.s32.totalorder %s351, %s352
      %p366 = scmp.eq.s32.totalorder %s35, 1
      %p367 = por %p365, %p366
      %p369 = scmp.ne.s32.totalorder %s352, %s368
      %p370 = scmp.eq.s32.totalorder %s35, 0
      %p371 = por %p369, %p370
      %s372 = ssub.s32 %s29, %s36
      %p373 = scmp.eq.s32.totalorder %s372, 0
      %s375 = sadd.s32 %s374, 1
      %s376 = scalar_select %p373, %s374, %s375
      %p379 = pneg %p373
      %p380 = scmp.eq.s32.totalorder %s29, 1
      %p381 = por %p379, %p380
      %p382 = scmp.ne.s32.totalorder %s374, %s377
      %p383 = scmp.eq.s32.totalorder %s29, 0
      %p384 = por %p382, %p383
      %p385 = scmp.ne.s32.totalorder %s374, %s377
      %p386 = scmp.eq.s32.totalorder %s34, 1
      %p387 = por %p385, %p386
      %p388 = scmp.ne.s32.totalorder %s377, %s378
      %p389 = scmp.eq.s32.totalorder %s34, 0
      %p390 = por %p388, %p389
      %p391 = scmp.ne.s32.totalorder %s377, %s378
      %p392 = scmp.eq.s32.totalorder %s35, 1
      %p393 = por %p391, %p392
      %p395 = scmp.ne.s32.totalorder %s378, %s394
      %p396 = scmp.eq.s32.totalorder %s35, 0
      %p397 = por %p395, %p396
      %p398 = scmp.le.s32.totalorder 1, %s29
      %p399 = scmp.lt.s32.totalorder %s29, 3
      %p400 = pnand %p398, %p399
      %p401 = pneg %p400
      // Predicated region
      $region9: #{vae_forward_with_targets.1} parent=5 // pred_check
        _
      $region10: #{vae_forward_with_targets.1} parent=5 // pred_check_branch
        %403 = sbr.rel (%p400) target = $region12
      $region11: #{vae_forward_with_targets.1} parent=5 // pred_region
        %s404 = ssub.s32 %s29, 1
        // Predicated region
        $region13: #{vae_forward_with_targets.1} parent=11 // pred_check
          %p405 = pneg %p128
        $region14: #{vae_forward_with_targets.1} parent=11 // pred_check_branch
          %407 = sbr.rel (%p405) target = $region16
        $region15: #{vae_forward_with_targets.1} parent=11 // pred_region
          %409 = vsyncadd [#allocation3], 0
          %s410 = sshll.u32 %s3, 4
          %s411 = int_to_ptr.hbm [resolvable:$true] %s410
          %s412 = sshll.u32 [#allocation2], 4
          %s413 = int_to_ptr.vmem [resolvable:$true] %s412
          %418 = dma.hbm_to_vmem [thread:$0]  %s411, 2048, %s413, [#allocation3], 128, 128, 8
        $region16: #{vae_forward_with_targets.1} parent=11 // pred_fallthru
          _
        // Predicated region
        $region17: #{vae_forward_with_targets.1} parent=11 // pred_check
          %p419 = pneg %p149
        $region18: #{vae_forward_with_targets.1} parent=11 // pred_check_branch
          %421 = sbr.rel (%p419) target = $region20
        $region19: #{vae_forward_with_targets.1} parent=11 // pred_region
          _
        $region20: #{vae_forward_with_targets.1} parent=11 // pred_fallthru
          _
        // Predicated region
        $region21: #{vae_forward_with_targets.1} parent=11 // pred_check
          %p422 = pneg %p170
        $region22: #{vae_forward_with_targets.1} parent=11 // pred_check_branch
          %424 = sbr.rel (%p422) target = $region24
        $region23: #{vae_forward_with_targets.1} parent=11 // pred_region
          %426 = vsyncadd [#allocation6], 0
          %s427 = sshll.u32 %s5, 4
          %s428 = int_to_ptr.hbm [resolvable:$true] %s427
          %s429 = sshll.u32 [#allocation5], 4
          %s430 = int_to_ptr.vmem [resolvable:$true] %s429
          %435 = dma.hbm_to_vmem [thread:$0]  %s428, 2048, %s430, [#allocation6], 128, 128, 8
        $region24: #{vae_forward_with_targets.1} parent=11 // pred_fallthru
          _
        // Predicated region
        $region25: #{vae_forward_with_targets.1} parent=11 // pred_check
          %p436 = pneg %p191
        $region26: #{vae_forward_with_targets.1} parent=11 // pred_check_branch
          %438 = sbr.rel (%p436) target = $region28
        $region27: #{vae_forward_with_targets.1} parent=11 // pred_region
          _
        $region28: #{vae_forward_with_targets.1} parent=11 // pred_fallthru
          _
        // Predicated region
        $region29: #{vae_forward_with_targets.1} parent=11 // pred_check
          %p439 = pneg %p212
        $region30: #{vae_forward_with_targets.1} parent=11 // pred_check_branch
          %441 = sbr.rel (%p439) target = $region32
        $region31: #{vae_forward_with_targets.1} parent=11 // pred_region
          %443 = vsyncadd [#allocation6], 0
          %s444 = sshll.u32 %s7, 4
          %s445 = int_to_ptr.hbm [resolvable:$true] %s444
          %s446 = sshll.u32 [#allocation7], 4
          %s447 = int_to_ptr.vmem [resolvable:$true] %s446
          %452 = dma.hbm_to_vmem [thread:$0]  %s445, 4096, %s447, [#allocation6], 256, 256, 16
        $region32: #{vae_forward_with_targets.1} parent=11 // pred_fallthru
          _
        // Predicated region
        $region33: #{vae_forward_with_targets.1} parent=11 // pred_check
          %p453 = pneg %p233
        $region34: #{vae_forward_with_targets.1} parent=11 // pred_check_branch
          %455 = sbr.rel (%p453) target = $region36
        $region35: #{vae_forward_with_targets.1} parent=11 // pred_region
          _
        $region36: #{vae_forward_with_targets.1} parent=11 // pred_fallthru
          _
        // Predicated region
        $region37: #{vae_forward_with_targets.1} parent=11 // pred_check
          %p456 = pneg %p254
        $region38: #{vae_forward_with_targets.1} parent=11 // pred_check_branch
          %458 = sbr.rel (%p456) target = $region40
        $region39: #{vae_forward_with_targets.1} parent=11 // pred_region
          %460 = vsyncadd [#allocation9], 0
          %s461 = sshll.u32 %s9, 4
          %s462 = int_to_ptr.hbm [resolvable:$true] %s461
          %s463 = sshll.u32 [#allocation8], 4
          %s464 = int_to_ptr.vmem [resolvable:$true] %s463
          %469 = dma.hbm_to_vmem [thread:$0]  %s462, 2048, %s464, [#allocation9], 128, 128, 8
        $region40: #{vae_forward_with_targets.1} parent=11 // pred_fallthru
          _
        // Predicated region
        $region41: #{vae_forward_with_targets.1} parent=11 // pred_check
          %p470 = pneg %p275
        $region42: #{vae_forward_with_targets.1} parent=11 // pred_check_branch
          %472 = sbr.rel (%p470) target = $region44
        $region43: #{vae_forward_with_targets.1} parent=11 // pred_region
          %474 = vsyncadd [#allocation9], 0
          %s475 = sshll.u32 %s10, 4
          %s476 = int_to_ptr.hbm [resolvable:$true] %s475
          %s477 = sshll.u32 [#allocation10], 4
          %s478 = int_to_ptr.vmem [resolvable:$true] %s477
          %483 = dma.hbm_to_vmem [thread:$0]  %s476, 4096, %s478, [#allocation9], 256, 256, 16
        $region44: #{vae_forward_with_targets.1} parent=11 // pred_fallthru
          _
        // Predicated region
        $region45: #{vae_forward_with_targets.1} parent=11 // pred_check
          %p484 = pneg %p296
        $region46: #{vae_forward_with_targets.1} parent=11 // pred_check_branch
          %486 = sbr.rel (%p484) target = $region48
        $region47: #{vae_forward_with_targets.1} parent=11 // pred_region
          _
        $region48: #{vae_forward_with_targets.1} parent=11 // pred_fallthru
          _
        // Predicated region
        $region49: #{vae_forward_with_targets.1} parent=11 // pred_check
          %p487 = pneg %p317
        $region50: #{vae_forward_with_targets.1} parent=11 // pred_check_branch
          %489 = sbr.rel (%p487) target = $region52
        $region51: #{vae_forward_with_targets.1} parent=11 // pred_region
          %491 = vsyncadd [#allocation12], 0
          %s492 = sshll.u32 %s12, 4
          %s493 = int_to_ptr.hbm [resolvable:$true] %s492
          %s494 = sshll.u32 [#allocation11], 4
          %s495 = int_to_ptr.vmem [resolvable:$true] %s494
          %500 = dma.hbm_to_vmem [thread:$0]  %s493, 4096, %s495, [#allocation12], 256, 256, 16
        $region52: #{vae_forward_with_targets.1} parent=11 // pred_fallthru
          _
        // Predicated region
        $region53: #{vae_forward_with_targets.1} parent=11 // pred_check
          %p501 = pneg %p338
        $region54: #{vae_forward_with_targets.1} parent=11 // pred_check_branch
          %503 = sbr.rel (%p501) target = $region56
        $region55: #{vae_forward_with_targets.1} parent=11 // pred_region
          _
        $region56: #{vae_forward_with_targets.1} parent=11 // pred_fallthru
          _
      $region12: #{vae_forward_with_targets.1} parent=5 // pred_fallthru
        _
      %p504 = scmp.lt.s32.totalorder %s29, 2
      // Predicated region
      $region57: #{vae_forward_with_targets.1} parent=5 // pred_check
        %p505 = pneg %p504
      $region58: #{vae_forward_with_targets.1} parent=5 // pred_check_branch
        %507 = sbr.rel (%p505) target = $region60
      $region59: #{vae_forward_with_targets.1} parent=5 // pred_region
        // Predicated region
        $region61: #{vae_forward_with_targets.1} parent=59 // pred_check
          %p508 = pneg %p49
        $region62: #{vae_forward_with_targets.1} parent=59 // pred_check_branch
          %510 = sbr.rel (%p508) target = $region64
        $region63: #{vae_forward_with_targets.1} parent=59 // pred_region
          %p511 = scmp.lt.s32.totalorder %s29, 1
          %s512 = scalar_select %p511, %s29, 1
          %s513 = smul.addr %s512, 8
          %s514 = scalar_lea.vmem %s0, %s513
        $region64: #{vae_forward_with_targets.1} parent=59 // pred_fallthru
          _
        // Predicated region
        $region65: #{vae_forward_with_targets.1} parent=59 // pred_check
          %p515 = pneg %p75
        $region66: #{vae_forward_with_targets.1} parent=59 // pred_check_branch
          %517 = sbr.rel (%p515) target = $region68
        $region67: #{vae_forward_with_targets.1} parent=59 // pred_region
          %p518 = scmp.lt.s32.totalorder %s29, 1
          %s519 = scalar_select %p518, %s29, 1
          %s520 = smul.addr %s519, 8
          %s521 = scalar_lea.vmem %s1, %s520
        $region68: #{vae_forward_with_targets.1} parent=59 // pred_fallthru
          _
        // Predicated region
        $region69: #{vae_forward_with_targets.1} parent=59 // pred_check
          %p522 = pneg %p101
        $region70: #{vae_forward_with_targets.1} parent=59 // pred_check_branch
          %524 = sbr.rel (%p522) target = $region72
        $region71: #{vae_forward_with_targets.1} parent=59 // pred_region
          %p525 = scmp.lt.s32.totalorder %s29, 1
          %s526 = scalar_select %p525, %s29, 1
          %s527 = smul.addr %s526, 8
          %s528 = scalar_lea.vmem %s2, %s527
        $region72: #{vae_forward_with_targets.1} parent=59 // pred_fallthru
          _
      $region60: #{vae_forward_with_targets.1} parent=5 // pred_fallthru
        _
      %p529 = scmp.le.s32.totalorder 1, %s29
      %p530 = scmp.lt.s32.totalorder %s29, 3
      %p531 = pnand %p529, %p530
      %p532 = pneg %p531
      // Predicated region
      $region73: #{vae_forward_with_targets.1} parent=5 // pred_check
        _
      $region74: #{vae_forward_with_targets.1} parent=5 // pred_check_branch
        %534 = sbr.rel (%p531) target = $region76
      $region75: #{vae_forward_with_targets.1} parent=5 // pred_region
        %s535 = ssub.s32 %s29, 1
        // Predicated region
        $region77: #{vae_forward_with_targets.1} parent=75 // pred_check
          %p536 = pneg %p128
        $region78: #{vae_forward_with_targets.1} parent=75 // pred_check_branch
          %538 = sbr.rel (%p536) target = $region80
        $region79: #{vae_forward_with_targets.1} parent=75 // pred_region
          %540 = dma.done [#allocation3], 2048
        $region80: #{vae_forward_with_targets.1} parent=75 // pred_fallthru
          _
        // Predicated region
        $region81: #{vae_forward_with_targets.1} parent=75 // pred_check
          %p541 = pneg %p170
        $region82: #{vae_forward_with_targets.1} parent=75 // pred_check_branch
          %543 = sbr.rel (%p541) target = $region84
        $region83: #{vae_forward_with_targets.1} parent=75 // pred_region
          %545 = dma.done [#allocation6], 2048
        $region84: #{vae_forward_with_targets.1} parent=75 // pred_fallthru
          _
        // Predicated region
        $region85: #{vae_forward_with_targets.1} parent=75 // pred_check
          %p546 = pneg %p212
        $region86: #{vae_forward_with_targets.1} parent=75 // pred_check_branch
          %548 = sbr.rel (%p546) target = $region88
        $region87: #{vae_forward_with_targets.1} parent=75 // pred_region
          %550 = dma.done [#allocation6], 4096
        $region88: #{vae_forward_with_targets.1} parent=75 // pred_fallthru
          _
        // Predicated region
        $region89: #{vae_forward_with_targets.1} parent=75 // pred_check
          %p551 = pneg %p254
        $region90: #{vae_forward_with_targets.1} parent=75 // pred_check_branch
          %553 = sbr.rel (%p551) target = $region92
        $region91: #{vae_forward_with_targets.1} parent=75 // pred_region
          %555 = dma.done [#allocation9], 2048
        $region92: #{vae_forward_with_targets.1} parent=75 // pred_fallthru
          _
        // Predicated region
        $region93: #{vae_forward_with_targets.1} parent=75 // pred_check
          %p556 = pneg %p275
        $region94: #{vae_forward_with_targets.1} parent=75 // pred_check_branch
          %558 = sbr.rel (%p556) target = $region96
        $region95: #{vae_forward_with_targets.1} parent=75 // pred_region
          %560 = dma.done [#allocation9], 4096
        $region96: #{vae_forward_with_targets.1} parent=75 // pred_fallthru
          _
        // Predicated region
        $region97: #{vae_forward_with_targets.1} parent=75 // pred_check
          %p561 = pneg %p317
        $region98: #{vae_forward_with_targets.1} parent=75 // pred_check_branch
          %563 = sbr.rel (%p561) target = $region100
        $region99: #{vae_forward_with_targets.1} parent=75 // pred_region
          %565 = dma.done [#allocation12], 4096
        $region100: #{vae_forward_with_targets.1} parent=75 // pred_fallthru
          _
        %p566 = scmp.lt.s32.totalorder %s34, 1
        %s567 = scalar_select %p566, %s34, 1
        %s568 = smul.addr %s567, 8
        %s569 = scalar_lea.vmem %s0, %s568
        %p570 = pneg %p55
        %p571 = pneg %p52
        %p572 = scmp.lt.s32.totalorder %s34, 1
        %s573 = scalar_select %p572, %s34, 1
        %s574 = smul.addr %s573, 8
        %s575 = scalar_lea.vmem %s1, %s574
        %p576 = pneg %p81
        %p577 = pneg %p78
        %p578 = scmp.lt.s32.totalorder %s34, 1
        %s579 = scalar_select %p578, %s34, 1
        %s580 = smul.addr %s579, 8
        %s581 = scalar_lea.vmem %s2, %s580
        %p582 = pneg %p107
        %p583 = pneg %p104
        %p584 = pneg %p128
        %p585 = pneg %p125
        %p586 = pneg %p149
        %p587 = pneg %p146
        %p588 = pneg %p170
        %p589 = pneg %p167
        %p590 = pneg %p191
        %p591 = pneg %p188
        %p592 = pneg %p212
        %p593 = pneg %p209
        %p594 = pneg %p233
        %p595 = pneg %p230
        %p596 = pneg %p254
        %p597 = pneg %p251
        %p598 = pneg %p275
        %p599 = pneg %p272
        %p600 = pneg %p296
        %p601 = pneg %p293
        %p602 = pneg %p317
        %p603 = pneg %p314
        %p604 = pneg %p338
        %p605 = pneg %p335
        %p606 = pneg %p364
        %p607 = pneg %p361
        %p608 = scmp.lt.s32.totalorder %s34, 1
        %s609 = scalar_select %p608, %s34, 1
        %s610 = smul.addr %s609, 8
        %s611 = scalar_lea.vmem %s14, %s610
        %p612 = pneg %p390
        %p613 = pneg %p387
        %s614 = sand.u32 %s377, 1
        %s615 = scalar_lea.sflag [#allocation4], %s614
        %s616 = sand.u32 %s377, 1
        %s617 = smul.addr %s616, 8
        %s618 = scalar_lea.vmem [#allocation13], %s617
        %p619 = scmp.lt.s32.totalorder %s34, 1
        %s620 = scalar_select %p619, %s34, 1
        %s621 = smul.addr %s620, 8
        %s622 = scalar_lea.vmem %s0, %s621
        %p623 = scmp.lt.s32.totalorder %s34, 1
        %s624 = scalar_select %p623, %s34, 1
        %s625 = smul.addr %s624, 8
        %s626 = scalar_lea.vmem %s1, %s625
        %p627 = scmp.lt.s32.totalorder %s34, 1
        %s628 = scalar_select %p627, %s34, 1
        %s629 = smul.addr %s628, 8
        %s630 = scalar_lea.vmem %s2, %s629
        %p631 = scmp.lt.s32.totalorder %s34, 1
        %s632 = scalar_select %p631, %s34, 1
        %s633 = smul.addr %s632, 8
        %s634 = scalar_lea.vmem %s14, %s633
        %v635 = vld [vmem:[%s622] sm:$0xff]
        %v636 = vld [vmem:[%s626] sm:$0xff]
        %v637 = vld [vmem:[#allocation7] sm:$0xff]
        %v638 = vld [vmem:[#allocation7 + $0x8] sm:$0xff]
        %v639 = vld [vmem:[#allocation7 + $0x10] sm:$0xff]
        %v640 = vld [vmem:[#allocation7 + $0x18] sm:$0xff]
        %v641 = vld [vmem:[#allocation7 + $0x20] sm:$0xff]
        %v642 = vld [vmem:[#allocation7 + $0x28] sm:$0xff]
        %v643 = vld [vmem:[#allocation7 + $0x30] sm:$0xff]
        %v644 = vld [vmem:[#allocation7 + $0x38] sm:$0xff]
        %v645 = vld [vmem:[#allocation7 + $0x40] sm:$0xff]
        %v646 = vld [vmem:[#allocation7 + $0x48] sm:$0xff]
        %v647 = vld [vmem:[#allocation7 + $0x50] sm:$0xff]
        %v648 = vld [vmem:[#allocation7 + $0x58] sm:$0xff]
        %v649 = vld [vmem:[#allocation7 + $0x60] sm:$0xff]
        %v650 = vld [vmem:[#allocation7 + $0x68] sm:$0xff]
        %v651 = vld [vmem:[#allocation7 + $0x70] sm:$0xff]
        %v652 = vld [vmem:[#allocation7 + $0x78] sm:$0xff]
        %v653 = vld [vmem:[#allocation7 + $0x80] sm:$0xff]
        %v654 = vld [vmem:[#allocation7 + $0x88] sm:$0xff]
        %v655 = vld [vmem:[#allocation7 + $0x90] sm:$0xff]
        %v656 = vld [vmem:[#allocation7 + $0x98] sm:$0xff]
        %v657 = vld [vmem:[#allocation7 + $0xa0] sm:$0xff]
        %v658 = vld [vmem:[#allocation7 + $0xa8] sm:$0xff]
        %v659 = vld [vmem:[#allocation7 + $0xb0] sm:$0xff]
        %v660 = vld [vmem:[#allocation7 + $0xb8] sm:$0xff]
        %v661 = vld [vmem:[#allocation7 + $0xc0] sm:$0xff]
        %v662 = vld [vmem:[#allocation7 + $0xc8] sm:$0xff]
        %v663 = vld [vmem:[#allocation7 + $0xd0] sm:$0xff]
        %v664 = vld [vmem:[#allocation7 + $0xd8] sm:$0xff]
        %v665 = vld [vmem:[#allocation7 + $0xe0] sm:$0xff]
        %v666 = vld [vmem:[#allocation7 + $0xe8] sm:$0xff]
        %v667 = vld [vmem:[#allocation7 + $0xf0] sm:$0xff]
        %v668 = vld [vmem:[#allocation7 + $0xf8] sm:$0xff]
        %v669 = vld [vmem:[%s8] sm:$0x3]
        %v671 = vperm.slane %v669, 0
        %v672 = vperm.slane %v669, 1
        %675 = vmatpush.msra.mxu0 %v667
        %676 = vmatpush.msra.mxu0 %v665
        %677 = vmatpush.msra.mxu0 %v663
        %678 = vmatpush.msra.mxu0 %v661
        %679 = vmatpush.msra.mxu0 %v659
        %680 = vmatpush.msra.mxu0 %v657
        %681 = vmatpush.msra.mxu0 %v655
        %682 = vmatpush.msra.mxu0 %v653
        %683 = vmatpush.msra.mxu0 %v651
        %684 = vmatpush.msra.mxu0 %v649
        %685 = vmatpush.msra.mxu0 %v647
        %686 = vmatpush.msra.mxu0 %v645
        %687 = vmatpush.msra.mxu0 %v643
        %688 = vmatpush.msra.mxu0 %v641
        %689 = vmatpush.msra.mxu0 %v639
        %690 = vmatpush.msra.mxu0 %v637
        %691 = vmatmul.f32.gmra.mxu0 %v635
        %v692 = vpop.f32.mrf.mxu0
        %v693 = vadd.f32 %v671, %v692
        %694 = vdwg.mxu0
        %695 = vmatpush.msra.mxu0 %v668
        %696 = vmatpush.msra.mxu0 %v666
        %697 = vmatpush.msra.mxu0 %v664
        %698 = vmatpush.msra.mxu0 %v662
        %699 = vmatpush.msra.mxu0 %v660
        %700 = vmatpush.msra.mxu0 %v658
        %701 = vmatpush.msra.mxu0 %v656
        %702 = vmatpush.msra.mxu0 %v654
        %703 = vmatpush.msra.mxu0 %v652
        %704 = vmatpush.msra.mxu0 %v650
        %705 = vmatpush.msra.mxu0 %v648
        %706 = vmatpush.msra.mxu0 %v646
        %707 = vmatpush.msra.mxu0 %v644
        %708 = vmatpush.msra.mxu0 %v642
        %709 = vmatpush.msra.mxu0 %v640
        %710 = vmatpush.msra.mxu0 %v638
        %711 = vmatmul.f32.gmra.mxu0 %v635
        %v712 = vpop.f32.mrf.mxu0
        %v713 = vadd.f32 %v672, %v712
        %714 = vdwg.mxu0
        %v715 = vtanh.pop %v693
        %v716 = vld [vmem:[#allocation11] sm:$0xff]
        %v717 = vld [vmem:[#allocation11 + $0x8] sm:$0xff]
        %v718 = vld [vmem:[#allocation11 + $0x10] sm:$0xff]
        %v719 = vld [vmem:[#allocation11 + $0x18] sm:$0xff]
        %v720 = vld [vmem:[#allocation11 + $0x20] sm:$0xff]
        %v721 = vld [vmem:[#allocation11 + $0x28] sm:$0xff]
        %v722 = vld [vmem:[#allocation11 + $0x30] sm:$0xff]
        %v723 = vld [vmem:[#allocation11 + $0x38] sm:$0xff]
        %v724 = vld [vmem:[#allocation11 + $0x40] sm:$0xff]
        %v725 = vld [vmem:[#allocation11 + $0x48] sm:$0xff]
        %v726 = vld [vmem:[#allocation11 + $0x50] sm:$0xff]
        %v727 = vld [vmem:[#allocation11 + $0x58] sm:$0xff]
        %v728 = vld [vmem:[#allocation11 + $0x60] sm:$0xff]
        %v729 = vld [vmem:[#allocation11 + $0x68] sm:$0xff]
        %v730 = vld [vmem:[#allocation11 + $0x70] sm:$0xff]
        %v731 = vld [vmem:[#allocation11 + $0x78] sm:$0xff]
        %v732 = vld [vmem:[#allocation11 + $0x80] sm:$0xff]
        %v733 = vld [vmem:[#allocation11 + $0x88] sm:$0xff]
        %v734 = vld [vmem:[#allocation11 + $0x90] sm:$0xff]
        %v735 = vld [vmem:[#allocation11 + $0x98] sm:$0xff]
        %v736 = vld [vmem:[#allocation11 + $0xa0] sm:$0xff]
        %v737 = vld [vmem:[#allocation11 + $0xa8] sm:$0xff]
        %v738 = vld [vmem:[#allocation11 + $0xb0] sm:$0xff]
        %v739 = vld [vmem:[#allocation11 + $0xb8] sm:$0xff]
        %v740 = vld [vmem:[#allocation11 + $0xc0] sm:$0xff]
        %v741 = vld [vmem:[#allocation11 + $0xc8] sm:$0xff]
        %v742 = vld [vmem:[#allocation11 + $0xd0] sm:$0xff]
        %v743 = vld [vmem:[#allocation11 + $0xd8] sm:$0xff]
        %v744 = vld [vmem:[#allocation11 + $0xe0] sm:$0xff]
        %v745 = vld [vmem:[#allocation11 + $0xe8] sm:$0xff]
        %v746 = vld [vmem:[#allocation11 + $0xf0] sm:$0xff]
        %v747 = vld [vmem:[#allocation11 + $0xf8] sm:$0xff]
        %v748 = vld [vmem:[%s13] sm:$0x3]
        %v750 = vperm.slane %v748, 0
        %v751 = vperm.slane %v748, 1
        %754 = vmatpush.msra.mxu0 %v746
        %755 = vmatpush.msra.mxu0 %v744
        %756 = vmatpush.msra.mxu0 %v742
        %757 = vmatpush.msra.mxu0 %v740
        %758 = vmatpush.msra.mxu0 %v738
        %759 = vmatpush.msra.mxu0 %v736
        %760 = vmatpush.msra.mxu0 %v734
        %761 = vmatpush.msra.mxu0 %v732
        %762 = vmatpush.msra.mxu0 %v730
        %763 = vmatpush.msra.mxu0 %v728
        %764 = vmatpush.msra.mxu0 %v726
        %765 = vmatpush.msra.mxu0 %v724
        %766 = vmatpush.msra.mxu0 %v722
        %767 = vmatpush.msra.mxu0 %v720
        %768 = vmatpush.msra.mxu0 %v718
        %769 = vmatpush.msra.mxu0 %v716
        %770 = vmatmul.f32.gmra.mxu0 %v715
        %v771 = vpop.f32.mrf.mxu0
        %v772 = vadd.f32 %v750, %v771
        %773 = vdwg.mxu0
        %774 = vmatpush.msra.mxu0 %v747
        %775 = vmatpush.msra.mxu0 %v745
        %776 = vmatpush.msra.mxu0 %v743
        %777 = vmatpush.msra.mxu0 %v741
        %778 = vmatpush.msra.mxu0 %v739
        %779 = vmatpush.msra.mxu0 %v737
        %780 = vmatpush.msra.mxu0 %v735
        %781 = vmatpush.msra.mxu0 %v733
        %782 = vmatpush.msra.mxu0 %v731
        %783 = vmatpush.msra.mxu0 %v729
        %784 = vmatpush.msra.mxu0 %v727
        %785 = vmatpush.msra.mxu0 %v725
        %786 = vmatpush.msra.mxu0 %v723
        %787 = vmatpush.msra.mxu0 %v721
        %788 = vmatpush.msra.mxu0 %v719
        %789 = vmatpush.msra.mxu0 %v717
        %790 = vmatmul.f32.gmra.mxu0 %v715
        %v791 = vpop.f32.mrf.mxu0
        %v792 = vadd.f32 %v751, %v791
        %793 = vdwg.mxu0
        %794 = vadd.xlane.f32.xlu0 %v636
        %v795 = vpop.xlane.xlu0 %794
        %v796 = vmax.f32 %v795, 1.0
        %v797 = vrcp.pop %v796
        %v798 = vld [vmem:[#allocation2] sm:$0xff]
        %v799 = vld [vmem:[#allocation2 + $0x8] sm:$0xff]
        %v800 = vld [vmem:[#allocation2 + $0x10] sm:$0xff]
        %v801 = vld [vmem:[#allocation2 + $0x18] sm:$0xff]
        %v802 = vld [vmem:[#allocation2 + $0x20] sm:$0xff]
        %v803 = vld [vmem:[#allocation2 + $0x28] sm:$0xff]
        %v804 = vld [vmem:[#allocation2 + $0x30] sm:$0xff]
        %v805 = vld [vmem:[#allocation2 + $0x38] sm:$0xff]
        %v806 = vld [vmem:[#allocation2 + $0x40] sm:$0xff]
        %v807 = vld [vmem:[#allocation2 + $0x48] sm:$0xff]
        %v808 = vld [vmem:[#allocation2 + $0x50] sm:$0xff]
        %v809 = vld [vmem:[#allocation2 + $0x58] sm:$0xff]
        %v810 = vld [vmem:[#allocation2 + $0x60] sm:$0xff]
        %v811 = vld [vmem:[#allocation2 + $0x68] sm:$0xff]
        %v812 = vld [vmem:[#allocation2 + $0x70] sm:$0xff]
        %v813 = vld [vmem:[#allocation2 + $0x78] sm:$0xff]
        %v814 = vld [vmem:[%s4] sm:$0x1]
        %v816 = vperm.slane %v814, 0
        %818 = vmatpush.msra.mxu0 %v813
        %819 = vmatpush.msra.mxu0 %v812
        %820 = vmatpush.msra.mxu0 %v811
        %821 = vmatpush.msra.mxu0 %v810
        %822 = vmatpush.msra.mxu0 %v809
        %823 = vmatpush.msra.mxu0 %v808
        %824 = vmatpush.msra.mxu0 %v807
        %825 = vmatpush.msra.mxu0 %v806
        %826 = vmatpush.msra.mxu0 %v805
        %827 = vmatpush.msra.mxu0 %v804
        %828 = vmatpush.msra.mxu0 %v803
        %829 = vmatpush.msra.mxu0 %v802
        %830 = vmatpush.msra.mxu0 %v801
        %831 = vmatpush.msra.mxu0 %v800
        %832 = vmatpush.msra.mxu0 %v799
        %833 = vmatpush.msra.mxu0 %v798
        %834 = vmatmul.f32.gmra.mxu0 %v636
        %v835 = vpop.f32.mrf.mxu0
        %v836 = vadd.f32 %v816, %v835
        %837 = vdwg.mxu0
        %v838 = vmul.f32 %v836, %v797
        %v839 = vld [vmem:[#allocation5] sm:$0xff]
        %v840 = vld [vmem:[#allocation5 + $0x8] sm:$0xff]
        %v841 = vld [vmem:[#allocation5 + $0x10] sm:$0xff]
        %v842 = vld [vmem:[#allocation5 + $0x18] sm:$0xff]
        %v843 = vld [vmem:[#allocation5 + $0x20] sm:$0xff]
        %v844 = vld [vmem:[#allocation5 + $0x28] sm:$0xff]
        %v845 = vld [vmem:[#allocation5 + $0x30] sm:$0xff]
        %v846 = vld [vmem:[#allocation5 + $0x38] sm:$0xff]
        %v847 = vld [vmem:[#allocation5 + $0x40] sm:$0xff]
        %v848 = vld [vmem:[#allocation5 + $0x48] sm:$0xff]
        %v849 = vld [vmem:[#allocation5 + $0x50] sm:$0xff]
        %v850 = vld [vmem:[#allocation5 + $0x58] sm:$0xff]
        %v851 = vld [vmem:[#allocation5 + $0x60] sm:$0xff]
        %v852 = vld [vmem:[#allocation5 + $0x68] sm:$0xff]
        %v853 = vld [vmem:[#allocation5 + $0x70] sm:$0xff]
        %v854 = vld [vmem:[#allocation5 + $0x78] sm:$0xff]
        %v855 = vld [vmem:[%s6] sm:$0x1]
        %v857 = vperm.slane %v855, 0
        %859 = vmatpush.msra.mxu0 %v854
        %860 = vmatpush.msra.mxu0 %v853
        %861 = vmatpush.msra.mxu0 %v852
        %862 = vmatpush.msra.mxu0 %v851
        %863 = vmatpush.msra.mxu0 %v850
        %864 = vmatpush.msra.mxu0 %v849
        %865 = vmatpush.msra.mxu0 %v848
        %866 = vmatpush.msra.mxu0 %v847
        %867 = vmatpush.msra.mxu0 %v846
        %868 = vmatpush.msra.mxu0 %v845
        %869 = vmatpush.msra.mxu0 %v844
        %870 = vmatpush.msra.mxu0 %v843
        %871 = vmatpush.msra.mxu0 %v842
        %872 = vmatpush.msra.mxu0 %v841
        %873 = vmatpush.msra.mxu0 %v840
        %874 = vmatpush.msra.mxu0 %v839
        %875 = vmatmul.f32.gmra.mxu0 %v838
        %v876 = vpop.f32.mrf.mxu0
        %v877 = vadd.f32 %v857, %v876
        %878 = vdwg.mxu0
        %v879 = vtanh.pop %v877
        %v880 = vld [vmem:[#allocation8] sm:$0xff]
        %v881 = vld [vmem:[#allocation8 + $0x8] sm:$0xff]
        %v882 = vld [vmem:[#allocation8 + $0x10] sm:$0xff]
        %v883 = vld [vmem:[#allocation8 + $0x18] sm:$0xff]
        %v884 = vld [vmem:[#allocation8 + $0x20] sm:$0xff]
        %v885 = vld [vmem:[#allocation8 + $0x28] sm:$0xff]
        %v886 = vld [vmem:[#allocation8 + $0x30] sm:$0xff]
        %v887 = vld [vmem:[#allocation8 + $0x38] sm:$0xff]
        %v888 = vld [vmem:[#allocation8 + $0x40] sm:$0xff]
        %v889 = vld [vmem:[#allocation8 + $0x48] sm:$0xff]
        %v890 = vld [vmem:[#allocation8 + $0x50] sm:$0xff]
        %v891 = vld [vmem:[#allocation8 + $0x58] sm:$0xff]
        %v892 = vld [vmem:[#allocation8 + $0x60] sm:$0xff]
        %v893 = vld [vmem:[#allocation8 + $0x68] sm:$0xff]
        %v894 = vld [vmem:[#allocation8 + $0x70] sm:$0xff]
        %v895 = vld [vmem:[#allocation8 + $0x78] sm:$0xff]
        %896 = vmatpush.msra.mxu0 %v895
        %897 = vmatpush.msra.mxu0 %v894
        %898 = vmatpush.msra.mxu0 %v893
        %899 = vmatpush.msra.mxu0 %v892
        %900 = vmatpush.msra.mxu0 %v891
        %901 = vmatpush.msra.mxu0 %v890
        %902 = vmatpush.msra.mxu0 %v889
        %903 = vmatpush.msra.mxu0 %v888
        %904 = vmatpush.msra.mxu0 %v887
        %905 = vmatpush.msra.mxu0 %v886
        %906 = vmatpush.msra.mxu0 %v885
        %907 = vmatpush.msra.mxu0 %v884
        %908 = vmatpush.msra.mxu0 %v883
        %909 = vmatpush.msra.mxu0 %v882
        %910 = vmatpush.msra.mxu0 %v881
        %911 = vmatpush.msra.mxu0 %v880
        %912 = vmatmul.f32.gmra.mxu0 %v879
        %v913 = vpop.f32.mrf.mxu0
        %v914 = vadd.f32 0.0, %v913
        %915 = vdwg.mxu0
        %v916 = vadd.f32 %v713, %v914
        %v917 = vtanh.pop %v916
        %v918 = vld [vmem:[#allocation10] sm:$0xff]
        %v919 = vld [vmem:[#allocation10 + $0x8] sm:$0xff]
        %v920 = vld [vmem:[#allocation10 + $0x10] sm:$0xff]
        %v921 = vld [vmem:[#allocation10 + $0x18] sm:$0xff]
        %v922 = vld [vmem:[#allocation10 + $0x20] sm:$0xff]
        %v923 = vld [vmem:[#allocation10 + $0x28] sm:$0xff]
        %v924 = vld [vmem:[#allocation10 + $0x30] sm:$0xff]
        %v925 = vld [vmem:[#allocation10 + $0x38] sm:$0xff]
        %v926 = vld [vmem:[#allocation10 + $0x40] sm:$0xff]
        %v927 = vld [vmem:[#allocation10 + $0x48] sm:$0xff]
        %v928 = vld [vmem:[#allocation10 + $0x50] sm:$0xff]
        %v929 = vld [vmem:[#allocation10 + $0x58] sm:$0xff]
        %v930 = vld [vmem:[#allocation10 + $0x60] sm:$0xff]
        %v931 = vld [vmem:[#allocation10 + $0x68] sm:$0xff]
        %v932 = vld [vmem:[#allocation10 + $0x70] sm:$0xff]
        %v933 = vld [vmem:[#allocation10 + $0x78] sm:$0xff]
        %v934 = vld [vmem:[#allocation10 + $0x80] sm:$0xff]
        %v935 = vld [vmem:[#allocation10 + $0x88] sm:$0xff]
        %v936 = vld [vmem:[#allocation10 + $0x90] sm:$0xff]
        %v937 = vld [vmem:[#allocation10 + $0x98] sm:$0xff]
        %v938 = vld [vmem:[#allocation10 + $0xa0] sm:$0xff]
        %v939 = vld [vmem:[#allocation10 + $0xa8] sm:$0xff]
        %v940 = vld [vmem:[#allocation10 + $0xb0] sm:$0xff]
        %v941 = vld [vmem:[#allocation10 + $0xb8] sm:$0xff]
        %v942 = vld [vmem:[#allocation10 + $0xc0] sm:$0xff]
        %v943 = vld [vmem:[#allocation10 + $0xc8] sm:$0xff]
        %v944 = vld [vmem:[#allocation10 + $0xd0] sm:$0xff]
        %v945 = vld [vmem:[#allocation10 + $0xd8] sm:$0xff]
        %v946 = vld [vmem:[#allocation10 + $0xe0] sm:$0xff]
        %v947 = vld [vmem:[#allocation10 + $0xe8] sm:$0xff]
        %v948 = vld [vmem:[#allocation10 + $0xf0] sm:$0xff]
        %v949 = vld [vmem:[#allocation10 + $0xf8] sm:$0xff]
        %v950 = vld [vmem:[%s11] sm:$0x3]
        %v952 = vperm.slane %v950, 0
        %v953 = vperm.slane %v950, 1
        %956 = vmatpush.msra.mxu0 %v948
        %957 = vmatpush.msra.mxu0 %v946
        %958 = vmatpush.msra.mxu0 %v944
        %959 = vmatpush.msra.mxu0 %v942
        %960 = vmatpush.msra.mxu0 %v940
        %961 = vmatpush.msra.mxu0 %v938
        %962 = vmatpush.msra.mxu0 %v936
        %963 = vmatpush.msra.mxu0 %v934
        %964 = vmatpush.msra.mxu0 %v932
        %965 = vmatpush.msra.mxu0 %v930
        %966 = vmatpush.msra.mxu0 %v928
        %967 = vmatpush.msra.mxu0 %v926
        %968 = vmatpush.msra.mxu0 %v924
        %969 = vmatpush.msra.mxu0 %v922
        %970 = vmatpush.msra.mxu0 %v920
        %971 = vmatpush.msra.mxu0 %v918
        %972 = vmatmul.f32.gmra.mxu0 %v917
        %v973 = vpop.f32.mrf.mxu0
        %v974 = vadd.f32 %v952, %v973
        %975 = vdwg.mxu0
        %976 = vmatpush.msra.mxu0 %v949
        %977 = vmatpush.msra.mxu0 %v947
        %978 = vmatpush.msra.mxu0 %v945
        %979 = vmatpush.msra.mxu0 %v943
        %980 = vmatpush.msra.mxu0 %v941
        %981 = vmatpush.msra.mxu0 %v939
        %982 = vmatpush.msra.mxu0 %v937
        %983 = vmatpush.msra.mxu0 %v935
        %984 = vmatpush.msra.mxu0 %v933
        %985 = vmatpush.msra.mxu0 %v931
        %986 = vmatpush.msra.mxu0 %v929
        %987 = vmatpush.msra.mxu0 %v927
        %988 = vmatpush.msra.mxu0 %v925
        %989 = vmatpush.msra.mxu0 %v923
        %990 = vmatpush.msra.mxu0 %v921
        %991 = vmatpush.msra.mxu0 %v919
        %992 = vmatmul.f32.gmra.mxu0 %v917
        %v993 = vpop.f32.mrf.mxu0
        %v994 = vadd.f32 %v953, %v993
        %995 = vdwg.mxu0
        %v996 = vld [vmem:[%s630] sm:$0xff]
        %v997 = vmul.f32 %v994, 0.5
        %v998 = vmul.f32 %v997, 1.442695
        %v999 = vpow.pop %v998
        %v1000 = vmul.f32 %v996, %v999
        %v1001 = vadd.f32 %v974, %v1000
        %v1002 = vsub.f32 %v994, %v792
        %v1003 = vsub.f32 %v974, %v772
        %v1004 = vmul.f32 %v1002, 1.442695
        %v1005 = vpow.pop %v1004
        %v1006 = vsub.f32 %v1002, %v1005
        %v1007 = vmul.f32 %v1003, %v1003
        %v1008 = vsub.f32 0.0, %v792
        %v1009 = vmul.f32 %v1008, 1.442695
        %v1010 = vpow.pop %v1009
        %v1011 = vmul.f32 %v1007, %v1010
        %v1012 = vsub.f32 %v1006, %v1011
        %v1013 = vadd.f32 %v1012, 1.0
        %1014 = vadd.xlane.f32.xlu0 %v1013
        %v1015 = vpop.xlane.xlu0 %1014
        %v1016 = vmul.f32 %v1015, -0.5
        %1017 = vst [vmem:[%s634] sm:$0xff] %v1016
        %1018 = vst [vmem:[%s618] sm:$0xff] %v1001
        %p1019 = scmp.lt.s32.totalorder %s34, 1
        %s1020 = scalar_select %p1019, %s34, 1
        %s1021 = smul.addr %s1020, 8
        %s1022 = scalar_lea.vmem %s14, %s1021
        %s1023 = sand.u32 %s377, 1
        %s1024 = scalar_lea.sflag [#allocation4], %s1023
        %s1025 = sand.u32 %s377, 1
        %s1026 = smul.addr %s1025, 8
        %s1027 = scalar_lea.vmem [#allocation13], %s1026
        // Predicated region
        $region101: #{vae_forward_with_targets.1} parent=75 // pred_check
          %p1028 = pneg %p361
        $region102: #{vae_forward_with_targets.1} parent=75 // pred_check_branch
          %1030 = sbr.rel (%p1028) target = $region104
        $region103: #{vae_forward_with_targets.1} parent=75 // pred_region
          _
        $region104: #{vae_forward_with_targets.1} parent=75 // pred_fallthru
          _
        // Predicated region
        $region105: #{vae_forward_with_targets.1} parent=75 // pred_check
          %p1031 = pneg %p387
        $region106: #{vae_forward_with_targets.1} parent=75 // pred_check_branch
          %1033 = sbr.rel (%p1031) target = $region108
        $region107: #{vae_forward_with_targets.1} parent=75 // pred_region
          %1035 = vsyncadd %s1024, 0
          %s1036 = smul.addr %s34, 8
          %s1037 = scalar_lea.hbm %s15, %s1036
          %s1039 = sshll.u32 %s1027, 4
          %s1040 = int_to_ptr.vmem [resolvable:$true] %s1039
          %s1041 = sshll.u32 %s1037, 4
          %s1042 = int_to_ptr.hbm [resolvable:$true] %s1041
          %1044 = dma.vmem_to_hbm [thread:$0]  %s1040, 128, %s1042, %s1024
        $region108: #{vae_forward_with_targets.1} parent=75 // pred_fallthru
          _
      $region76: #{vae_forward_with_targets.1} parent=5 // pred_fallthru
        _
      %p1045 = scmp.le.s32.totalorder 2, %s29
      // Predicated region
      $region109: #{vae_forward_with_targets.1} parent=5 // pred_check
        %p1046 = pneg %p1045
      $region110: #{vae_forward_with_targets.1} parent=5 // pred_check_branch
        %1048 = sbr.rel (%p1046) target = $region112
      $region111: #{vae_forward_with_targets.1} parent=5 // pred_region
        %s1049 = ssub.s32 %s29, 2
        // Predicated region
        $region113: #{vae_forward_with_targets.1} parent=111 // pred_check
          %p1050 = pneg %p367
        $region114: #{vae_forward_with_targets.1} parent=111 // pred_check_branch
          %1052 = sbr.rel (%p1050) target = $region116
        $region115: #{vae_forward_with_targets.1} parent=111 // pred_region
          %p1053 = scmp.lt.s32.totalorder %s35, 1
          %s1054 = scalar_select %p1053, %s35, 1
          %s1055 = smul.addr %s1054, 8
          %s1056 = scalar_lea.vmem %s14, %s1055
        $region116: #{vae_forward_with_targets.1} parent=111 // pred_fallthru
          _
        // Predicated region
        $region117: #{vae_forward_with_targets.1} parent=111 // pred_check
          %p1057 = pneg %p393
        $region118: #{vae_forward_with_targets.1} parent=111 // pred_check_branch
          %1059 = sbr.rel (%p1057) target = $region120
        $region119: #{vae_forward_with_targets.1} parent=111 // pred_region
          %s1060 = sand.u32 %s378, 1
          %s1061 = scalar_lea.sflag [#allocation4], %s1060
          %s1062 = sand.u32 %s378, 1
          %s1063 = smul.addr %s1062, 8
          %s1064 = scalar_lea.vmem [#allocation13], %s1063
          %1066 = dma.done %s1061, 128
        $region120: #{vae_forward_with_targets.1} parent=111 // pred_fallthru
          _
      $region112: #{vae_forward_with_targets.1} parent=5 // pred_fallthru
        _
    $region6: #{vae_forward_with_targets.1} parent=1 // loop_footer
      %s33 = sadd.s32 1, %s29
    $region7: #{vae_forward_with_targets.1} parent=1 // loop_footer_branch
      %28 = sbr.rel target = $region3
    $region8: #{vae_forward_with_targets.1} parent=1 // loop_exit
      _
    %1067 = vsyncpa [#allocation3], 1
    %s1068 = scalar_lea.sflag [#allocation3], 1
    %1069 = vsyncpa %s1068, 1
    %1070 = vsyncpa [#allocation6], 1
    %1071 = vsyncpa [#allocation9], 1
    %1072 = vsyncpa [#allocation12], 1
    %1073 = vsyncpa [#allocation4], 1
    %s1074 = scalar_lea.sflag [#allocation4], 1
    %1075 = vsyncpa %s1074, 1

</llo_original>
